<compile_context>
chip_gen: v7x
topology: tpu7x:2x2x1
jax: 0.10.0
libtpu: 0.0.40
codegen_flags: <defaults>
</compile_context>

<pallas_src>
import math
import functools

import jax
import jax.numpy as jnp
from jax import lax
from jax.experimental import pallas as pl
from jax.experimental.pallas import tpu as pltpu


def _mha_body(q_ref, k_ref, v_ref, bias_ref, wq_ref, wk_ref, wv_ref, wo_ref,
              o_ref, *, num_heads, d_k, sm_scale, compute_dtype):
    cd = compute_dtype
    q = q_ref[0]                      # (tq, D)
    k = k_ref[0]                      # (S,  D)
    v = v_ref[0]                      # (S,  D)

    # Fused projections: all heads in one MXU call each (N = H*d_k = D).
    qp = jnp.dot(q, wq_ref[...], preferred_element_type=jnp.float32).astype(cd)
    kp = jnp.dot(k, wk_ref[...], preferred_element_type=jnp.float32).astype(cd)
    vp = jnp.dot(v, wv_ref[...], preferred_element_type=jnp.float32).astype(cd)

    bias = None if bias_ref is None else bias_ref[0]   # (tq, S) additive bias

    head_outs = []
    for h in range(num_heads):        # static unrolled loop, static lane slices
        lo = h * d_k
        qi = qp[:, lo:lo + d_k]       # (tq, d_k)
        ki = kp[:, lo:lo + d_k]       # (S,  d_k)
        vi = vp[:, lo:lo + d_k]       # (S,  d_k)

        # Contract last dims directly -> no explicit ki.T (keeps XLU free).
        s = lax.dot_general(qi, ki, (((1,), (1,)), ((), ())),
                            preferred_element_type=jnp.float32)     # (tq, S)
        s = s * sm_scale
        if bias is not None:
            s = s + bias              # 0 / -1e30 additive mask bias

        # Numerically-stable softmax in f32 (VPU/EUP path).
        m = jnp.max(s, axis=-1, keepdims=True)
        e = jnp.exp(s - m)
        denom = jnp.sum(e, axis=-1, keepdims=True)
        p = (e * pl.reciprocal(denom, approx=True)).astype(cd)

        head_outs.append(jnp.dot(p, vi, preferred_element_type=jnp.float32))

    ctx = jnp.concatenate(head_outs, axis=-1).astype(cd)            # (tq, H*d_k)
    out = jnp.dot(ctx, wo_ref[...], preferred_element_type=jnp.float32)
    o_ref[0] = out.astype(o_ref.dtype)


def _mha_kernel(q_ref, k_ref, v_ref, wq_ref, wk_ref, wv_ref, wo_ref, o_ref,
                **kw):
    _mha_body(q_ref, k_ref, v_ref, None, wq_ref, wk_ref, wv_ref, wo_ref,
              o_ref, **kw)


def _mha_masked_kernel(q_ref, k_ref, v_ref, bias_ref, wq_ref, wk_ref, wv_ref,
                       wo_ref, o_ref, **kw):
    _mha_body(q_ref, k_ref, v_ref, bias_ref, wq_ref, wk_ref, wv_ref, wo_ref,
              o_ref, **kw)


def multi_head_attention(Q, K, V, W_q, W_k, W_v, W_o, mask=None, *,
                         num_heads, block_q=None, compute_dtype=None):
    """
    Q, K, V : (B, S, D) float32
    W_q/W_k/W_v : (D, H*d_k)  fused per-head projections (x @ W form)
    W_o     : (H*d_v, D)      output projection (x @ W form)
    mask    : (B, S, S) or None (1 = keep, 0 = mask out)
    returns : (B, S, D) in Q.dtype
    """
    B, S, D = Q.shape
    assert D % num_heads == 0
    d_k = D // num_heads
    out_dtype = Q.dtype
    cd = jnp.dtype(compute_dtype) if compute_dtype is not None else jnp.dtype(Q.dtype)

    if block_q is None:
        block_q = min(S, 256)
    if S % block_q != 0:
        block_q = S
    grid = (B, S // block_q)

    sm_scale = 1.0 / math.sqrt(d_k)

    # Cast matmul operands to the compute dtype (bf16 halves HBM/VMEM traffic,
    # MXU-native); accumulation / softmax stay f32 inside the kernel.
    Qc = Q.astype(cd)
    Kc = K.astype(cd)
    Vc = V.astype(cd)
    W_qc = W_q.astype(cd)
    W_kc = W_k.astype(cd)
    W_vc = W_v.astype(cd)
    W_oc = W_o.astype(cd)

    q_spec = pl.BlockSpec((1, block_q, D), lambda b, i: (b, i, 0))
    kv_spec = pl.BlockSpec((1, S, D), lambda b, i: (b, 0, 0))
    w_spec = pl.BlockSpec((D, D), lambda b, i: (0, 0))          # resident weights
    out_spec = pl.BlockSpec((1, block_q, D), lambda b, i: (b, i, 0))

    # VMEM budget estimate (double-buffered I/O blocks + resident weights +
    # in-kernel intermediates), with headroom; clamped to portable limits.
    esz = jnp.dtype(cd).itemsize
    est = (2 * (block_q * D + 2 * S * D) * esz        # Q / K / V blocks (x2 buf)
           + 4 * D * D * esz                          # resident weights
           + 2 * block_q * D * 4                      # output block (x2 buf)
           + (block_q * D + 2 * S * D) * 4            # qp / kp / vp
           + 3 * block_q * S * 4                      # scores / exp / probs
           + 2 * block_q * D * 4)                     # ctx + out
    if mask is not None:
        est += 3 * block_q * S * 4                    # bias block (x2 buf) + use
    vmem_limit = int(min(64 * 2**20, max(32 * 2**20, 4 * est)))

    kw = dict(num_heads=num_heads, d_k=d_k, sm_scale=sm_scale, compute_dtype=cd)

    if mask is None:
        kernel = functools.partial(_mha_kernel, **kw)
        in_specs = [q_spec, kv_spec, kv_spec, w_spec, w_spec, w_spec, w_spec]
        args = (Qc, Kc, Vc, W_qc, W_kc, W_vc, W_oc)
    else:
        # Precomputed additive bias: 0 where kept, -1e30 where masked
        # (finite -> no NaN for fully-masked rows).
        bias = jnp.where(mask == 0, jnp.float32(-1e30), jnp.float32(0.0))
        bias_spec = pl.BlockSpec((1, block_q, S), lambda b, i: (b, i, 0))
        kernel = functools.partial(_mha_masked_kernel, **kw)
        in_specs = [q_spec, kv_spec, kv_spec, bias_spec,
                    w_spec, w_spec, w_spec, w_spec]
        args = (Qc, Kc, Vc, bias, W_qc, W_kc, W_vc, W_oc)

    return pl.pallas_call(
        kernel,
        out_shape=jax.ShapeDtypeStruct((B, S, D), out_dtype),
        grid_spec=pltpu.PrefetchScalarGridSpec(
            num_scalar_prefetch=0,
            grid=grid,
            in_specs=in_specs,
            out_specs=out_spec,
        ),
        compiler_params=pltpu.CompilerParams(
            dimension_semantics=("parallel", "parallel"),
            vmem_limit_bytes=vmem_limit),
    )(*args)


def _reference(Q, K, V, W_q, W_k, W_v, W_o, num_heads, mask=None):
    B, S, D = Q.shape
    d_k = D // num_heads
    qp = Q @ W_q
    kp = K @ W_k
    vp = V @ W_v
    qh = qp.reshape(B, S, num_heads, d_k).transpose(0, 2, 1, 3)
    kh = kp.reshape(B, S, num_heads, d_k).transpose(0, 2, 1, 3)
    vh = vp.reshape(B, S, num_heads, d_k).transpose(0, 2, 1, 3)
    s = jnp.einsum('bhqd,bhkd->bhqk', qh, kh) / math.sqrt(d_k)
    if mask is not None:
        s = jnp.where(mask[:, None] == 0, -1e30, s)
    a = jax.nn.softmax(s, axis=-1)
    ctx = jnp.einsum('bhqk,bhkd->bhqd', a, vh)
    ctx = ctx.transpose(0, 2, 1, 3).reshape(B, S, D)
    return ctx @ W_o


if __name__ == "__main__":
    B, S, d_model, num_head = 2, 16, 128, 4
    d_k = d_model // num_head

    key = jax.random.PRNGKey(0)
    kq, kk, kv, kwq, kwk, kwv, kwo = jax.random.split(key, 7)

    Q = jax.random.normal(kq, (B, S, d_model), dtype=jnp.float32)
    K = jax.random.normal(kk, (B, S, d_model), dtype=jnp.float32)
    V = jax.random.normal(kv, (B, S, d_model), dtype=jnp.float32)

    # Per-head nn.Linear weights (PyTorch layout (d_k, d_model), y = x @ W.T),
    # fused into single (d_model, H*d_k) matrices (x @ W form).
    scale = 1.0 / math.sqrt(d_model)
    WQ_h = jax.random.uniform(kwq, (num_head, d_k, d_model), jnp.float32, -scale, scale)
    WK_h = jax.random.uniform(kwk, (num_head, d_k, d_model), jnp.float32, -scale, scale)
    WV_h = jax.random.uniform(kwv, (num_head, d_k, d_model), jnp.float32, -scale, scale)
    W_q = jnp.transpose(WQ_h, (2, 0, 1)).reshape(d_model, num_head * d_k)
    W_k = jnp.transpose(WK_h, (2, 0, 1)).reshape(d_model, num_head * d_k)
    W_v = jnp.transpose(WV_h, (2, 0, 1)).reshape(d_model, num_head * d_k)

    scale_o = 1.0 / math.sqrt(num_head * d_k)
    WO_pt = jax.random.uniform(kwo, (d_model, num_head * d_k), jnp.float32,
                               -scale_o, scale_o)          # nn.Linear weight
    W_o = WO_pt.T                                          # (H*d_k, d_model)

    # 1) maskless, f32 compute
    out = multi_head_attention(Q, K, V, W_q, W_k, W_v, W_o, mask=None,
                               num_heads=num_head)
    out = jax.block_until_ready(out)
    ref = _reference(Q, K, V, W_q, W_k, W_v, W_o, num_head, mask=None)
    assert out.shape == (B, S, d_model)
    assert jnp.allclose(out, ref, atol=5e-3, rtol=5e-3), "maskless mismatch"

    # 2) causal mask, f32 compute
    causal = jnp.broadcast_to(jnp.tril(jnp.ones((S, S), jnp.int32)), (B, S, S))
    out_m = multi_head_attention(Q, K, V, W_q, W_k, W_v, W_o, mask=causal,
                                 num_heads=num_head)
    out_m = jax.block_until_ready(out_m)
    ref_m = _reference(Q, K, V, W_q, W_k, W_v, W_o, num_head, mask=causal)
    assert jnp.allclose(out_m, ref_m, atol=5e-3, rtol=5e-3), "masked mismatch"

    # 3) bf16 compute path (MXU-native), looser tolerance vs f32 reference
    out_bf = multi_head_attention(Q, K, V, W_q, W_k, W_v, W_o, mask=None,
                                  num_heads=num_head,
                                  compute_dtype=jnp.bfloat16)
    out_bf = jax.block_until_ready(out_bf)
    assert jnp.allclose(out_bf.astype(jnp.float32), ref, atol=5e-2, rtol=5e-2), \
        "bf16 mismatch"

    print("KERNEL_OK")
</pallas_src>

<mosaic_0001>
module attributes {stable_mosaic.version = 11 : i64} {
  func.func @_mha_kernel(%arg0: i32, %arg1: i32, %arg2: memref<1x16x128xf32, #tpu.memory_space<vmem>>, %arg3: memref<1x16x128xf32, #tpu.memory_space<vmem>>, %arg4: memref<1x16x128xf32, #tpu.memory_space<vmem>>, %arg5: memref<128x128xf32, #tpu.memory_space<vmem>>, %arg6: memref<128x128xf32, #tpu.memory_space<vmem>>, %arg7: memref<128x128xf32, #tpu.memory_space<vmem>>, %arg8: memref<128x128xf32, #tpu.memory_space<vmem>>, %arg9: memref<1x16x128xf32, #tpu.memory_space<vmem>>) attributes {dimension_semantics = [#tpu.dimension_semantics<parallel>, #tpu.dimension_semantics<parallel>], iteration_bounds = array<i64: 2, 1>, scalar_prefetch = 0 : i64, scratch_operands = 0 : i64, tpu.core_type = #tpu.core_type<tc>, window_params = [{transform_indices = @transform_0, window_bounds = array<i64: 1, 16, 128>}, {transform_indices = @transform_1, window_bounds = array<i64: 1, 16, 128>}, {transform_indices = @transform_2, window_bounds = array<i64: 1, 16, 128>}, {pipeline_mode = #tpu.pipeline_mode<synchronous>, transform_indices = @transform_3, window_bounds = array<i64: 128, 128>}, {pipeline_mode = #tpu.pipeline_mode<synchronous>, transform_indices = @transform_4, window_bounds = array<i64: 128, 128>}, {pipeline_mode = #tpu.pipeline_mode<synchronous>, transform_indices = @transform_5, window_bounds = array<i64: 128, 128>}, {pipeline_mode = #tpu.pipeline_mode<synchronous>, transform_indices = @transform_6, window_bounds = array<i64: 128, 128>}, {transform_indices = @transform_7, window_bounds = array<i64: 1, 16, 128>}]} {
    %c0 = arith.constant 0 : index
    %c0_0 = arith.constant 0 : index
    %c0_1 = arith.constant 0 : index
    %0 = vector.load %arg2[%c0, %c0_0, %c0_1] : memref<1x16x128xf32, #tpu.memory_space<vmem>>, vector<1x16x128xf32>
    %1 = vector.shape_cast %0 : vector<1x16x128xf32> to vector<16x128xf32>
    %c0_2 = arith.constant 0 : index
    %c0_3 = arith.constant 0 : index
    %c0_4 = arith.constant 0 : index
    %2 = vector.load %arg3[%c0_2, %c0_3, %c0_4] : memref<1x16x128xf32, #tpu.memory_space<vmem>>, vector<1x16x128xf32>
    %3 = vector.shape_cast %2 : vector<1x16x128xf32> to vector<16x128xf32>
    %c0_5 = arith.constant 0 : index
    %c0_6 = arith.constant 0 : index
    %c0_7 = arith.constant 0 : index
    %4 = vector.load %arg4[%c0_5, %c0_6, %c0_7] : memref<1x16x128xf32, #tpu.memory_space<vmem>>, vector<1x16x128xf32>
    %5 = vector.shape_cast %4 : vector<1x16x128xf32> to vector<16x128xf32>
    %c0_8 = arith.constant 0 : index
    %c0_9 = arith.constant 0 : index
    %6 = vector.load %arg5[%c0_8, %c0_9] : memref<128x128xf32, #tpu.memory_space<vmem>>, vector<128x128xf32>
    %cst = arith.constant dense<0.000000e+00> : vector<16x128xf32>
    %7 = tpu.matmul %1, %6, %cst {dimension_numbers = #tpu.dot_dimension_numbers<[1], [0], [0], [1], [0, 0, 1, 1], [], []>} : vector<16x128xf32>, vector<128x128xf32>, vector<16x128xf32> -> vector<16x128xf32>
    %c0_10 = arith.constant 0 : index
    %c0_11 = arith.constant 0 : index
    %8 = vector.load %arg6[%c0_10, %c0_11] : memref<128x128xf32, #tpu.memory_space<vmem>>, vector<128x128xf32>
    %cst_12 = arith.constant dense<0.000000e+00> : vector<16x128xf32>
    %9 = tpu.matmul %3, %8, %cst_12 {dimension_numbers = #tpu.dot_dimension_numbers<[1], [0], [0], [1], [0, 0, 1, 1], [], []>} : vector<16x128xf32>, vector<128x128xf32>, vector<16x128xf32> -> vector<16x128xf32>
    %c0_13 = arith.constant 0 : index
    %c0_14 = arith.constant 0 : index
    %10 = vector.load %arg7[%c0_13, %c0_14] : memref<128x128xf32, #tpu.memory_space<vmem>>, vector<128x128xf32>
    %cst_15 = arith.constant dense<0.000000e+00> : vector<16x128xf32>
    %11 = tpu.matmul %5, %10, %cst_15 {dimension_numbers = #tpu.dot_dimension_numbers<[1], [0], [0], [1], [0, 0, 1, 1], [], []>} : vector<16x128xf32>, vector<128x128xf32>, vector<16x128xf32> -> vector<16x128xf32>
    %12 = vector.extract_strided_slice %7 {offsets = [0, 0], sizes = [16, 32], strides = [1, 1]} : vector<16x128xf32> to vector<16x32xf32>
    %13 = vector.extract_strided_slice %9 {offsets = [0, 0], sizes = [16, 32], strides = [1, 1]} : vector<16x128xf32> to vector<16x32xf32>
    %14 = vector.extract_strided_slice %11 {offsets = [0, 0], sizes = [16, 32], strides = [1, 1]} : vector<16x128xf32> to vector<16x32xf32>
    %cst_16 = arith.constant dense<0.000000e+00> : vector<16x16xf32>
    %15 = tpu.matmul %12, %13, %cst_16 {dimension_numbers = #tpu.dot_dimension_numbers<[1], [1], [0], [0], [0, 0, 1, 0], [], []>} : vector<16x32xf32>, vector<16x32xf32>, vector<16x16xf32> -> vector<16x16xf32>
    %cst_17 = arith.constant 0.176776692 : f32
    %16 = vector.broadcast %cst_17 : f32 to vector<16x16xf32>
    %17 = arith.mulf %15, %16 : vector<16x16xf32>
    %cst_18 = arith.constant dense<0xFF800000> : vector<16xf32>
    %18 = vector.multi_reduction <maximumf>, %17, %cst_18 [1] : vector<16x16xf32> to vector<16xf32>
    %19 = vector.shape_cast %18 : vector<16xf32> to vector<16x1xf32>
    %20 = vector.broadcast %19 : vector<16x1xf32> to vector<16x16xf32>
    %21 = arith.subf %17, %20 : vector<16x16xf32>
    %22 = math.exp %21 : vector<16x16xf32>
    %cst_19 = arith.constant dense<0.000000e+00> : vector<16xf32>
    %23 = vector.multi_reduction <add>, %22, %cst_19 [1] : vector<16x16xf32> to vector<16xf32>
    %24 = vector.shape_cast %23 : vector<16xf32> to vector<16x1xf32>
    %25 = tpu.reciprocal %24 {approx = true} : vector<16x1xf32> -> vector<16x1xf32>
    %26 = vector.broadcast %25 : vector<16x1xf32> to vector<16x16xf32>
    %27 = arith.mulf %22, %26 : vector<16x16xf32>
    %cst_20 = arith.constant dense<0.000000e+00> : vector<16x32xf32>
    %28 = tpu.matmul %27, %14, %cst_20 {dimension_numbers = #tpu.dot_dimension_numbers<[1], [0], [0], [1], [0, 0, 1, 1], [], []>} : vector<16x16xf32>, vector<16x32xf32>, vector<16x32xf32> -> vector<16x32xf32>
    %29 = vector.extract_strided_slice %7 {offsets = [0, 32], sizes = [16, 32], strides = [1, 1]} : vector<16x128xf32> to vector<16x32xf32>
    %30 = vector.extract_strided_slice %9 {offsets = [0, 32], sizes = [16, 32], strides = [1, 1]} : vector<16x128xf32> to vector<16x32xf32>
    %31 = vector.extract_strided_slice %11 {offsets = [0, 32], sizes = [16, 32], strides = [1, 1]} : vector<16x128xf32> to vector<16x32xf32>
    %cst_21 = arith.constant dense<0.000000e+00> : vector<16x16xf32>
    %32 = tpu.matmul %29, %30, %cst_21 {dimension_numbers = #tpu.dot_dimension_numbers<[1], [1], [0], [0], [0, 0, 1, 0], [], []>} : vector<16x32xf32>, vector<16x32xf32>, vector<16x16xf32> -> vector<16x16xf32>
    %cst_22 = arith.constant 0.176776692 : f32
    %33 = vector.broadcast %cst_22 : f32 to vector<16x16xf32>
    %34 = arith.mulf %32, %33 : vector<16x16xf32>
    %cst_23 = arith.constant dense<0xFF800000> : vector<16xf32>
    %35 = vector.multi_reduction <maximumf>, %34, %cst_23 [1] : vector<16x16xf32> to vector<16xf32>
    %36 = vector.shape_cast %35 : vector<16xf32> to vector<16x1xf32>
    %37 = vector.broadcast %36 : vector<16x1xf32> to vector<16x16xf32>
    %38 = arith.subf %34, %37 : vector<16x16xf32>
    %39 = math.exp %38 : vector<16x16xf32>
    %cst_24 = arith.constant dense<0.000000e+00> : vector<16xf32>
    %40 = vector.multi_reduction <add>, %39, %cst_24 [1] : vector<16x16xf32> to vector<16xf32>
    %41 = vector.shape_cast %40 : vector<16xf32> to vector<16x1xf32>
    %42 = tpu.reciprocal %41 {approx = true} : vector<16x1xf32> -> vector<16x1xf32>
    %43 = vector.broadcast %42 : vector<16x1xf32> to vector<16x16xf32>
    %44 = arith.mulf %39, %43 : vector<16x16xf32>
    %cst_25 = arith.constant dense<0.000000e+00> : vector<16x32xf32>
    %45 = tpu.matmul %44, %31, %cst_25 {dimension_numbers = #tpu.dot_dimension_numbers<[1], [0], [0], [1], [0, 0, 1, 1], [], []>} : vector<16x16xf32>, vector<16x32xf32>, vector<16x32xf32> -> vector<16x32xf32>
    %46 = vector.extract_strided_slice %7 {offsets = [0, 64], sizes = [16, 32], strides = [1, 1]} : vector<16x128xf32> to vector<16x32xf32>
    %47 = vector.extract_strided_slice %9 {offsets = [0, 64], sizes = [16, 32], strides = [1, 1]} : vector<16x128xf32> to vector<16x32xf32>
    %48 = vector.extract_strided_slice %11 {offsets = [0, 64], sizes = [16, 32], strides = [1, 1]} : vector<16x128xf32> to vector<16x32xf32>
    %cst_26 = arith.constant dense<0.000000e+00> : vector<16x16xf32>
    %49 = tpu.matmul %46, %47, %cst_26 {dimension_numbers = #tpu.dot_dimension_numbers<[1], [1], [0], [0], [0, 0, 1, 0], [], []>} : vector<16x32xf32>, vector<16x32xf32>, vector<16x16xf32> -> vector<16x16xf32>
    %cst_27 = arith.constant 0.176776692 : f32
    %50 = vector.broadcast %cst_27 : f32 to vector<16x16xf32>
    %51 = arith.mulf %49, %50 : vector<16x16xf32>
    %cst_28 = arith.constant dense<0xFF800000> : vector<16xf32>
    %52 = vector.multi_reduction <maximumf>, %51, %cst_28 [1] : vector<16x16xf32> to vector<16xf32>
    %53 = vector.shape_cast %52 : vector<16xf32> to vector<16x1xf32>
    %54 = vector.broadcast %53 : vector<16x1xf32> to vector<16x16xf32>
    %55 = arith.subf %51, %54 : vector<16x16xf32>
    %56 = math.exp %55 : vector<16x16xf32>
    %cst_29 = arith.constant dense<0.000000e+00> : vector<16xf32>
    %57 = vector.multi_reduction <add>, %56, %cst_29 [1] : vector<16x16xf32> to vector<16xf32>
    %58 = vector.shape_cast %57 : vector<16xf32> to vector<16x1xf32>
    %59 = tpu.reciprocal %58 {approx = true} : vector<16x1xf32> -> vector<16x1xf32>
    %60 = vector.broadcast %59 : vector<16x1xf32> to vector<16x16xf32>
    %61 = arith.mulf %56, %60 : vector<16x16xf32>
    %cst_30 = arith.constant dense<0.000000e+00> : vector<16x32xf32>
    %62 = tpu.matmul %61, %48, %cst_30 {dimension_numbers = #tpu.dot_dimension_numbers<[1], [0], [0], [1], [0, 0, 1, 1], [], []>} : vector<16x16xf32>, vector<16x32xf32>, vector<16x32xf32> -> vector<16x32xf32>
    %63 = vector.extract_strided_slice %7 {offsets = [0, 96], sizes = [16, 32], strides = [1, 1]} : vector<16x128xf32> to vector<16x32xf32>
    %64 = vector.extract_strided_slice %9 {offsets = [0, 96], sizes = [16, 32], strides = [1, 1]} : vector<16x128xf32> to vector<16x32xf32>
    %65 = vector.extract_strided_slice %11 {offsets = [0, 96], sizes = [16, 32], strides = [1, 1]} : vector<16x128xf32> to vector<16x32xf32>
    %cst_31 = arith.constant dense<0.000000e+00> : vector<16x16xf32>
    %66 = tpu.matmul %63, %64, %cst_31 {dimension_numbers = #tpu.dot_dimension_numbers<[1], [1], [0], [0], [0, 0, 1, 0], [], []>} : vector<16x32xf32>, vector<16x32xf32>, vector<16x16xf32> -> vector<16x16xf32>
    %cst_32 = arith.constant 0.176776692 : f32
    %67 = vector.broadcast %cst_32 : f32 to vector<16x16xf32>
    %68 = arith.mulf %66, %67 : vector<16x16xf32>
    %cst_33 = arith.constant dense<0xFF800000> : vector<16xf32>
    %69 = vector.multi_reduction <maximumf>, %68, %cst_33 [1] : vector<16x16xf32> to vector<16xf32>
    %70 = vector.shape_cast %69 : vector<16xf32> to vector<16x1xf32>
    %71 = vector.broadcast %70 : vector<16x1xf32> to vector<16x16xf32>
    %72 = arith.subf %68, %71 : vector<16x16xf32>
    %73 = math.exp %72 : vector<16x16xf32>
    %cst_34 = arith.constant dense<0.000000e+00> : vector<16xf32>
    %74 = vector.multi_reduction <add>, %73, %cst_34 [1] : vector<16x16xf32> to vector<16xf32>
    %75 = vector.shape_cast %74 : vector<16xf32> to vector<16x1xf32>
    %76 = tpu.reciprocal %75 {approx = true} : vector<16x1xf32> -> vector<16x1xf32>
    %77 = vector.broadcast %76 : vector<16x1xf32> to vector<16x16xf32>
    %78 = arith.mulf %73, %77 : vector<16x16xf32>
    %cst_35 = arith.constant dense<0.000000e+00> : vector<16x32xf32>
    %79 = tpu.matmul %78, %65, %cst_35 {dimension_numbers = #tpu.dot_dimension_numbers<[1], [0], [0], [1], [0, 0, 1, 1], [], []>} : vector<16x16xf32>, vector<16x32xf32>, vector<16x32xf32> -> vector<16x32xf32>
    %80 = tpu.concatenate %28, %45, %62, %79 in 1 : vector<16x32xf32>, vector<16x32xf32>, vector<16x32xf32>, vector<16x32xf32> -> vector<16x128xf32>
    %c0_36 = arith.constant 0 : index
    %c0_37 = arith.constant 0 : index
    %81 = vector.load %arg8[%c0_36, %c0_37] : memref<128x128xf32, #tpu.memory_space<vmem>>, vector<128x128xf32>
    %cst_38 = arith.constant dense<0.000000e+00> : vector<16x128xf32>
    %82 = tpu.matmul %80, %81, %cst_38 {dimension_numbers = #tpu.dot_dimension_numbers<[1], [0], [0], [1], [0, 0, 1, 1], [], []>} : vector<16x128xf32>, vector<128x128xf32>, vector<16x128xf32> -> vector<16x128xf32>
    %c0_39 = arith.constant 0 : index
    %c0_40 = arith.constant 0 : index
    %c0_41 = arith.constant 0 : index
    %83 = vector.load %arg9[%c0_39, %c0_40, %c0_41] : memref<1x16x128xf32, #tpu.memory_space<vmem>>, vector<1x16x128xf32>
    %84 = vector.shape_cast %83 : vector<1x16x128xf32> to vector<16x128xf32>
    %85 = vector.shape_cast %82 : vector<16x128xf32> to vector<1x16x128xf32>
    tpu.vector_store %arg9[%c0_39, %c0_40, %c0_41], %85 {strides = array<i32>} : memref<1x16x128xf32, #tpu.memory_space<vmem>>, vector<1x16x128xf32>,
    return
  }
  func.func @transform_0(%arg0: i32, %arg1: i32) -> (i32, i32, i32) {
    %c0_i32 = arith.constant 0 : i32
    %c0_i32_0 = arith.constant 0 : i32
    return %arg0, %arg1, %c0_i32 : i32, i32, i32
  }
  func.func @transform_1(%arg0: i32, %arg1: i32) -> (i32, i32, i32) {
    %c0_i32 = arith.constant 0 : i32
    %c0_i32_0 = arith.constant 0 : i32
    %c0_i32_1 = arith.constant 0 : i32
    return %arg0, %c0_i32, %c0_i32_0 : i32, i32, i32
  }
  func.func @transform_2(%arg0: i32, %arg1: i32) -> (i32, i32, i32) {
    %c0_i32 = arith.constant 0 : i32
    %c0_i32_0 = arith.constant 0 : i32
    %c0_i32_1 = arith.constant 0 : i32
    return %arg0, %c0_i32, %c0_i32_0 : i32, i32, i32
  }
  func.func @transform_3(%arg0: i32, %arg1: i32) -> (i32, i32) {
    %c0_i32 = arith.constant 0 : i32
    %c0_i32_0 = arith.constant 0 : i32
    %c0_i32_1 = arith.constant 0 : i32
    return %c0_i32, %c0_i32_0 : i32, i32
  }
  func.func @transform_4(%arg0: i32, %arg1: i32) -> (i32, i32) {
    %c0_i32 = arith.constant 0 : i32
    %c0_i32_0 = arith.constant 0 : i32
    %c0_i32_1 = arith.constant 0 : i32
    return %c0_i32, %c0_i32_0 : i32, i32
  }
  func.func @transform_5(%arg0: i32, %arg1: i32) -> (i32, i32) {
    %c0_i32 = arith.constant 0 : i32
    %c0_i32_0 = arith.constant 0 : i32
    %c0_i32_1 = arith.constant 0 : i32
    return %c0_i32, %c0_i32_0 : i32, i32
  }
  func.func @transform_6(%arg0: i32, %arg1: i32) -> (i32, i32) {
    %c0_i32 = arith.constant 0 : i32
    %c0_i32_0 = arith.constant 0 : i32
    %c0_i32_1 = arith.constant 0 : i32
    return %c0_i32, %c0_i32_0 : i32, i32
  }
  func.func @transform_7(%arg0: i32, %arg1: i32) -> (i32, i32, i32) {
    %c0_i32 = arith.constant 0 : i32
    %c0_i32_0 = arith.constant 0 : i32
    return %arg0, %arg1, %c0_i32 : i32, i32, i32
  }
}

</mosaic_0001>

<llo_original>
// kernel: tpu_custom_call.1
$region0: #{tpu_custom_call.1}
  #allocation0 [shape = 'u32[]', space=smem, size = 0x4, offset = 0x4, fixed_abs, tag = 'smem constant byte address 0x4 - core index']
  #allocation1 [shape = 'u32[144,128]{1,0:T(1,128)}', space=vmem, size = 0x12000, scoped, tag = 'internal scratch']
  %s0 = inlined_call_operand.hbm [shape: f32[2,16,128], index: 0, kind: input, shape index: {}]
  %s1 = inlined_call_operand.hbm [shape: f32[2,16,128], index: 1, kind: input, shape index: {}]
  %s2 = inlined_call_operand.hbm [shape: f32[2,16,128], index: 2, kind: input, shape index: {}]
  %s3 = inlined_call_operand.hbm [shape: f32[128,128], index: 3, kind: input, shape index: {}]
  %s4 = inlined_call_operand.hbm [shape: f32[128,128], index: 4, kind: input, shape index: {}]
  %s5 = inlined_call_operand.hbm [shape: f32[128,128], index: 5, kind: input, shape index: {}]
  %s6 = inlined_call_operand.hbm [shape: f32[128,128], index: 6, kind: input, shape index: {}]
  %s7 = inlined_call_operand.hbm [shape: f32[2,16,128], index: 7, kind: output, shape index: {}]
  %s8 = sld [smem:[#allocation0]]
  $region89: #{tpu_custom_call.1} parent=0
    _
  %s10 = ssub.s32 1, %s8
  %s11 = scalar_select 0, %s10, %s8
  $region1: #{tpu_custom_call.1} parent=0
    #allocation2 [shape = 'u8[16384]{0}', space=vmem, size = 0x4000, scoped, tag = 'input window, operand 0']
    #allocation3 [shape = 's32[2]{0}', space=sflag, size = 0x8, scoped, tag = 'scoped memory for tpu_custom_call.1']
    #allocation4 [shape = 's32[2]{0}', space=sflag, size = 0x8, scoped, tag = 'scoped memory for tpu_custom_call.1']
    #allocation5 [shape = 'u8[16384]{0}', space=vmem, size = 0x4000, scoped, tag = 'input window, operand 1']
    #allocation6 [shape = 's32[2]{0}', space=sflag, size = 0x8, scoped, tag = 'scoped memory for tpu_custom_call.1']
    #allocation7 [shape = 'u8[16384]{0}', space=vmem, size = 0x4000, scoped, tag = 'input window, operand 2']
    #allocation8 [shape = 'u8[65536]{0}', space=vmem, size = 0x10000, scoped, tag = 'input window, operand 3, single buffered']
    #allocation9 [shape = 's32[1]{0}', space=sflag, size = 0x4, scoped, tag = 'scoped memory for tpu_custom_call.1']
    #allocation10 [shape = 'u8[65536]{0}', space=vmem, size = 0x10000, scoped, tag = 'input window, operand 4, single buffered']
    #allocation11 [shape = 'u8[65536]{0}', space=vmem, size = 0x10000, scoped, tag = 'input window, operand 5, single buffered']
    #allocation12 [shape = 's32[1]{0}', space=sflag, size = 0x4, scoped, tag = 'scoped memory for tpu_custom_call.1']
    #allocation13 [shape = 'u8[65536]{0}', space=vmem, size = 0x10000, scoped, tag = 'input window, operand 6, single buffered']
    #allocation14 [shape = 'u8[16384]{0}', space=vmem, size = 0x4000, scoped, tag = 'output window, operand 0']
    %12 = vsyncpa [#allocation3], 0
    %s13 = scalar_lea.sflag [#allocation3], 1
    %14 = vsyncpa %s13, 0
    %15 = vsyncpa [#allocation6], 0
    %s16 = scalar_lea.sflag [#allocation6], 1
    %17 = vsyncpa %s16, 0
    %18 = vsyncpa [#allocation9], 0
    %19 = vsyncpa [#allocation12], 0
    %20 = vsyncpa [#allocation4], 0
    %s21 = scalar_lea.sflag [#allocation4], 1
    %22 = vsyncpa %s21, 0
    loop: start=0, step=1, limit=4
    $region2: #{tpu_custom_call.1} parent=1 // loop_pre_header
      _
    $region3: #{tpu_custom_call.1} parent=1 // loop_header
      %s24 = sphi 0, %s28
      %p25 = scmp.ge.s32.totalorder %s24, 4
      %s31 = sphi 0, %s43
      %s32 = sphi 0, %s39
      %s33 = sphi 0, %s31
      %s34 = sphi 0, %s32
      %s35 = sphi 0, %s33
      %s36 = sphi 0, %s34
      %s48 = sphi 0, %s50
      %s51 = sphi 0, %s48
      %s52 = sphi 0, %s51
      %s68 = sphi 0, %s52
      %s74 = sphi 0, %s76
      %s77 = sphi 0, %s74
      %s78 = sphi 0, %s77
      %s94 = sphi 0, %s78
      %s100 = sphi 0, %s102
      %s103 = sphi 0, %s100
      %s104 = sphi 0, %s103
      %s120 = sphi 0, %s104
      %s124 = sphi 0, %s124
      %s126 = sphi 0, %s124
      %s127 = sphi 0, %s126
      %s141 = sphi 0, %s127
      %s145 = sphi 0, %s145
      %s147 = sphi 0, %s145
      %s148 = sphi 0, %s147
      %s162 = sphi 0, %s148
      %s166 = sphi 0, %s166
      %s168 = sphi 0, %s166
      %s169 = sphi 0, %s168
      %s183 = sphi 0, %s169
      %s187 = sphi 0, %s187
      %s189 = sphi 0, %s187
      %s190 = sphi 0, %s189
      %s204 = sphi 0, %s190
      %s212 = sphi 0, %s214
      %s215 = sphi 0, %s212
      %s216 = sphi 0, %s215
      %s232 = sphi 0, %s216
    $region4: #{tpu_custom_call.1} parent=1 // loop_header_branch
      %27 = sbr.rel (%p25) target = $region8
    $region5: #{tpu_custom_call.1} parent=1 // loop_body
      %s29 = ssub.s32 %s24, 1
      %s30 = ssub.s32 %s24, 2
      %s37 = sadd.s32 1, %s32
      %p38 = scmp.ge.s32.totalorder %s37, 1
      %s39 = scalar_select %p38, 0, %s37
      %s40 = sadd.s32 1, %s31
      %s41 = scalar_select %p38, %s40, %s31
      %p42 = scmp.ge.s32.totalorder %s41, 2
      %s43 = scalar_select %p42, 0, %s41
      %s44 = ssub.s32 %s31, %s43
      %s45 = ssub.s32 %s32, %s39
      %s46 = sor.u32 %s44, %s45
      %p47 = scmp.eq.s32.totalorder %s46, 0
      %s49 = sadd.s32 %s48, 1
      %s50 = scalar_select %p47, %s48, %s49
      %p53 = pneg %p47
      %p54 = scmp.eq.s32.totalorder %s24, 1
      %p55 = por %p53, %p54
      %p56 = scmp.ne.s32.totalorder %s48, %s51
      %p57 = scmp.eq.s32.totalorder %s24, 0
      %p58 = por %p56, %p57
      %p59 = scmp.ne.s32.totalorder %s48, %s51
      %p60 = scmp.eq.s32.totalorder %s29, 1
      %p61 = por %p59, %p60
      %p62 = scmp.ne.s32.totalorder %s51, %s52
      %p63 = scmp.eq.s32.totalorder %s29, 0
      %p64 = por %p62, %p63
      %p65 = scmp.ne.s32.totalorder %s51, %s52
      %p66 = scmp.eq.s32.totalorder %s30, 1
      %p67 = por %p65, %p66
      %p69 = scmp.ne.s32.totalorder %s52, %s68
      %p70 = scmp.eq.s32.totalorder %s30, 0
      %p71 = por %p69, %p70
      %s72 = ssub.s32 %s31, %s43
      %p73 = scmp.eq.s32.totalorder %s72, 0
      %s75 = sadd.s32 %s74, 1
      %s76 = scalar_select %p73, %s74, %s75
      %p79 = pneg %p73
      %p80 = scmp.eq.s32.totalorder %s24, 1
      %p81 = por %p79, %p80
      %p82 = scmp.ne.s32.totalorder %s74, %s77
      %p83 = scmp.eq.s32.totalorder %s24, 0
      %p84 = por %p82, %p83
      %p85 = scmp.ne.s32.totalorder %s74, %s77
      %p86 = scmp.eq.s32.totalorder %s29, 1
      %p87 = por %p85, %p86
      %p88 = scmp.ne.s32.totalorder %s77, %s78
      %p89 = scmp.eq.s32.totalorder %s29, 0
      %p90 = por %p88, %p89
      %p91 = scmp.ne.s32.totalorder %s77, %s78
      %p92 = scmp.eq.s32.totalorder %s30, 1
      %p93 = por %p91, %p92
      %p95 = scmp.ne.s32.totalorder %s78, %s94
      %p96 = scmp.eq.s32.totalorder %s30, 0
      %p97 = por %p95, %p96
      %s98 = ssub.s32 %s31, %s43
      %p99 = scmp.eq.s32.totalorder %s98, 0
      %s101 = sadd.s32 %s100, 1
      %s102 = scalar_select %p99, %s100, %s101
      %p105 = pneg %p99
      %p106 = scmp.eq.s32.totalorder %s24, 1
      %p107 = por %p105, %p106
      %p108 = scmp.ne.s32.totalorder %s100, %s103
      %p109 = scmp.eq.s32.totalorder %s24, 0
      %p110 = por %p108, %p109
      %p111 = scmp.ne.s32.totalorder %s100, %s103
      %p112 = scmp.eq.s32.totalorder %s29, 1
      %p113 = por %p111, %p112
      %p114 = scmp.ne.s32.totalorder %s103, %s104
      %p115 = scmp.eq.s32.totalorder %s29, 0
      %p116 = por %p114, %p115
      %p117 = scmp.ne.s32.totalorder %s103, %s104
      %p118 = scmp.eq.s32.totalorder %s30, 1
      %p119 = por %p117, %p118
      %p121 = scmp.ne.s32.totalorder %s104, %s120
      %p122 = scmp.eq.s32.totalorder %s30, 0
      %p123 = por %p121, %p122
      %s125 = sadd.s32 %s124, 1
      %p128 = scmp.eq.s32.totalorder %s24, 1
      %p129 = scmp.ne.s32.totalorder %s124, %s126
      %p130 = scmp.eq.s32.totalorder %s24, 0
      %p131 = por %p129, %p130
      %p132 = scmp.ne.s32.totalorder %s124, %s126
      %p133 = scmp.eq.s32.totalorder %s29, 1
      %p134 = por %p132, %p133
      %p135 = scmp.ne.s32.totalorder %s126, %s127
      %p136 = scmp.eq.s32.totalorder %s29, 0
      %p137 = por %p135, %p136
      %p138 = scmp.ne.s32.totalorder %s126, %s127
      %p139 = scmp.eq.s32.totalorder %s30, 1
      %p140 = por %p138, %p139
      %p142 = scmp.ne.s32.totalorder %s127, %s141
      %p143 = scmp.eq.s32.totalorder %s30, 0
      %p144 = por %p142, %p143
      %s146 = sadd.s32 %s145, 1
      %p149 = scmp.eq.s32.totalorder %s24, 1
      %p150 = scmp.ne.s32.totalorder %s145, %s147
      %p151 = scmp.eq.s32.totalorder %s24, 0
      %p152 = por %p150, %p151
      %p153 = scmp.ne.s32.totalorder %s145, %s147
      %p154 = scmp.eq.s32.totalorder %s29, 1
      %p155 = por %p153, %p154
      %p156 = scmp.ne.s32.totalorder %s147, %s148
      %p157 = scmp.eq.s32.totalorder %s29, 0
      %p158 = por %p156, %p157
      %p159 = scmp.ne.s32.totalorder %s147, %s148
      %p160 = scmp.eq.s32.totalorder %s30, 1
      %p161 = por %p159, %p160
      %p163 = scmp.ne.s32.totalorder %s148, %s162
      %p164 = scmp.eq.s32.totalorder %s30, 0
      %p165 = por %p163, %p164
      %s167 = sadd.s32 %s166, 1
      %p170 = scmp.eq.s32.totalorder %s24, 1
      %p171 = scmp.ne.s32.totalorder %s166, %s168
      %p172 = scmp.eq.s32.totalorder %s24, 0
      %p173 = por %p171, %p172
      %p174 = scmp.ne.s32.totalorder %s166, %s168
      %p175 = scmp.eq.s32.totalorder %s29, 1
      %p176 = por %p174, %p175
      %p177 = scmp.ne.s32.totalorder %s168, %s169
      %p178 = scmp.eq.s32.totalorder %s29, 0
      %p179 = por %p177, %p178
      %p180 = scmp.ne.s32.totalorder %s168, %s169
      %p181 = scmp.eq.s32.totalorder %s30, 1
      %p182 = por %p180, %p181
      %p184 = scmp.ne.s32.totalorder %s169, %s183
      %p185 = scmp.eq.s32.totalorder %s30, 0
      %p186 = por %p184, %p185
      %s188 = sadd.s32 %s187, 1
      %p191 = scmp.eq.s32.totalorder %s24, 1
      %p192 = scmp.ne.s32.totalorder %s187, %s189
      %p193 = scmp.eq.s32.totalorder %s24, 0
      %p194 = por %p192, %p193
      %p195 = scmp.ne.s32.totalorder %s187, %s189
      %p196 = scmp.eq.s32.totalorder %s29, 1
      %p197 = por %p195, %p196
      %p198 = scmp.ne.s32.totalorder %s189, %s190
      %p199 = scmp.eq.s32.totalorder %s29, 0
      %p200 = por %p198, %p199
      %p201 = scmp.ne.s32.totalorder %s189, %s190
      %p202 = scmp.eq.s32.totalorder %s30, 1
      %p203 = por %p201, %p202
      %p205 = scmp.ne.s32.totalorder %s190, %s204
      %p206 = scmp.eq.s32.totalorder %s30, 0
      %p207 = por %p205, %p206
      %s208 = ssub.s32 %s31, %s43
      %s209 = ssub.s32 %s32, %s39
      %s210 = sor.u32 %s208, %s209
      %p211 = scmp.eq.s32.totalorder %s210, 0
      %s213 = sadd.s32 %s212, 1
      %s214 = scalar_select %p211, %s212, %s213
      %p217 = pneg %p211
      %p218 = scmp.eq.s32.totalorder %s24, 1
      %p219 = por %p217, %p218
      %p220 = scmp.ne.s32.totalorder %s212, %s215
      %p221 = scmp.eq.s32.totalorder %s24, 0
      %p222 = por %p220, %p221
      %p223 = scmp.ne.s32.totalorder %s212, %s215
      %p224 = scmp.eq.s32.totalorder %s29, 1
      %p225 = por %p223, %p224
      %p226 = scmp.ne.s32.totalorder %s215, %s216
      %p227 = scmp.eq.s32.totalorder %s29, 0
      %p228 = por %p226, %p227
      %p229 = scmp.ne.s32.totalorder %s215, %s216
      %p230 = scmp.eq.s32.totalorder %s30, 1
      %p231 = por %p229, %p230
      %p233 = scmp.ne.s32.totalorder %s216, %s232
      %p234 = scmp.eq.s32.totalorder %s30, 0
      %p235 = por %p233, %p234
      %p236 = scmp.le.s32.totalorder 1, %s24
      %p237 = scmp.lt.s32.totalorder %s24, 3
      %p238 = pnand %p236, %p237
      %p239 = pneg %p238
      // Predicated region
      $region9: #{tpu_custom_call.1} parent=5 // pred_check
        _
      $region10: #{tpu_custom_call.1} parent=5 // pred_check_branch
        %241 = sbr.rel (%p238) target = $region12
      $region11: #{tpu_custom_call.1} parent=5 // pred_region
        %s242 = ssub.s32 %s24, 1
        // Predicated region
        $region13: #{tpu_custom_call.1} parent=11 // pred_check
          %p243 = pneg %p137
        $region14: #{tpu_custom_call.1} parent=11 // pred_check_branch
          %245 = sbr.rel (%p243) target = $region16
        $region15: #{tpu_custom_call.1} parent=11 // pred_region
          %s247 = ssub.s32 2048, 2048
          %248 = vsyncadd [#allocation9], %s247
          %s249 = sshll.u32 [#allocation8], 4
          %s250 = int_to_ptr.vmem [resolvable:$true] %s249
          %255 = dma.hbm_to_vmem [thread:$0]  %s3, 2048, %s250, [#allocation9], 128, 128, 8
        $region16: #{tpu_custom_call.1} parent=11 // pred_fallthru
          _
        // Predicated region
        $region17: #{tpu_custom_call.1} parent=11 // pred_check
          %p256 = pneg %p158
        $region18: #{tpu_custom_call.1} parent=11 // pred_check_branch
          %258 = sbr.rel (%p256) target = $region20
        $region19: #{tpu_custom_call.1} parent=11 // pred_region
          %s260 = ssub.s32 2048, 2048
          %261 = vsyncadd [#allocation9], %s260
          %s262 = sshll.u32 [#allocation10], 4
          %s263 = int_to_ptr.vmem [resolvable:$true] %s262
          %268 = dma.hbm_to_vmem [thread:$0]  %s4, 2048, %s263, [#allocation9], 128, 128, 8
        $region20: #{tpu_custom_call.1} parent=11 // pred_fallthru
          _
        // Predicated region
        $region21: #{tpu_custom_call.1} parent=11 // pred_check
          %p269 = pneg %p179
        $region22: #{tpu_custom_call.1} parent=11 // pred_check_branch
          %271 = sbr.rel (%p269) target = $region24
        $region23: #{tpu_custom_call.1} parent=11 // pred_region
          %s273 = ssub.s32 2048, 2048
          %274 = vsyncadd [#allocation12], %s273
          %s275 = sshll.u32 [#allocation11], 4
          %s276 = int_to_ptr.vmem [resolvable:$true] %s275
          %281 = dma.hbm_to_vmem [thread:$0]  %s5, 2048, %s276, [#allocation12], 128, 128, 8
        $region24: #{tpu_custom_call.1} parent=11 // pred_fallthru
          _
        // Predicated region
        $region25: #{tpu_custom_call.1} parent=11 // pred_check
          %p282 = pneg %p200
        $region26: #{tpu_custom_call.1} parent=11 // pred_check_branch
          %284 = sbr.rel (%p282) target = $region28
        $region27: #{tpu_custom_call.1} parent=11 // pred_region
          %s286 = ssub.s32 2048, 2048
          %287 = vsyncadd [#allocation12], %s286
          %s288 = sshll.u32 [#allocation13], 4
          %s289 = int_to_ptr.vmem [resolvable:$true] %s288
          %294 = dma.hbm_to_vmem [thread:$0]  %s6, 2048, %s289, [#allocation12], 128, 128, 8
        $region28: #{tpu_custom_call.1} parent=11 // pred_fallthru
          _
      $region12: #{tpu_custom_call.1} parent=5 // pred_fallthru
        _
      %p295 = scmp.lt.s32.totalorder %s24, 2
      // Predicated region
      $region29: #{tpu_custom_call.1} parent=5 // pred_check
        %p296 = pneg %p295
      $region30: #{tpu_custom_call.1} parent=5 // pred_check_branch
        %298 = sbr.rel (%p296) target = $region32
      $region31: #{tpu_custom_call.1} parent=5 // pred_region
        // Predicated region
        $region33: #{tpu_custom_call.1} parent=31 // pred_check
          %p299 = pneg %p58
        $region34: #{tpu_custom_call.1} parent=31 // pred_check_branch
          %301 = sbr.rel (%p299) target = $region36
        $region35: #{tpu_custom_call.1} parent=31 // pred_region
          %s302 = sand.u32 %s48, 1
          %s303 = scalar_lea.sflag [#allocation3], %s302
          %s304 = sand.u32 %s48, 1
          %s305 = smul.addr %s304, 16
          %s306 = scalar_lea.vmem [#allocation2], %s305
          %s307 = smul.u32 2, %s32
          %s309 = ssub.s32 256, 256
          %310 = vsyncadd %s303, %s309
          %s311 = smul.addr %s31, 2
          %s312 = sadd.s32 %s307, %s311
          %s313 = smul.addr %s312, 128
          %s314 = scalar_lea.hbm %s0, %s313
          %s315 = sshll.u32 %s306, 4
          %s316 = int_to_ptr.vmem [resolvable:$true] %s315
          %321 = dma.hbm_to_vmem [thread:$0]  %s314, 256, %s316, %s303, 128, 128, 8
        $region36: #{tpu_custom_call.1} parent=31 // pred_fallthru
          _
        // Predicated region
        $region37: #{tpu_custom_call.1} parent=31 // pred_check
          %p322 = pneg %p84
        $region38: #{tpu_custom_call.1} parent=31 // pred_check_branch
          %324 = sbr.rel (%p322) target = $region40
        $region39: #{tpu_custom_call.1} parent=31 // pred_region
          %s325 = sand.u32 %s24, 1
          %s326 = scalar_lea.sflag [#allocation6], %s325
          %s327 = sand.u32 %s74, 1
          %s328 = smul.addr %s327, 16
          %s329 = scalar_lea.vmem [#allocation5], %s328
          %s331 = ssub.s32 256, 256
          %332 = vsyncadd %s326, %s331
          %s333 = smul.addr %s31, 2
          %s334 = smul.addr %s333, 128
          %s335 = scalar_lea.hbm %s1, %s334
          %s336 = sshll.u32 %s329, 4
          %s337 = int_to_ptr.vmem [resolvable:$true] %s336
          %342 = dma.hbm_to_vmem [thread:$0]  %s335, 256, %s337, %s326, 128, 128, 8
        $region40: #{tpu_custom_call.1} parent=31 // pred_fallthru
          _
        // Predicated region
        $region41: #{tpu_custom_call.1} parent=31 // pred_check
          %p343 = pneg %p110
        $region42: #{tpu_custom_call.1} parent=31 // pred_check_branch
          %345 = sbr.rel (%p343) target = $region44
        $region43: #{tpu_custom_call.1} parent=31 // pred_region
          %s346 = sand.u32 %s24, 1
          %s347 = scalar_lea.sflag [#allocation6], %s346
          %s348 = sand.u32 %s100, 1
          %s349 = smul.addr %s348, 16
          %s350 = scalar_lea.vmem [#allocation7], %s349
          %s352 = ssub.s32 256, 256
          %353 = vsyncadd %s347, %s352
          %s354 = smul.addr %s31, 2
          %s355 = smul.addr %s354, 128
          %s356 = scalar_lea.hbm %s2, %s355
          %s357 = sshll.u32 %s350, 4
          %s358 = int_to_ptr.vmem [resolvable:$true] %s357
          %363 = dma.hbm_to_vmem [thread:$0]  %s356, 256, %s358, %s347, 128, 128, 8
        $region44: #{tpu_custom_call.1} parent=31 // pred_fallthru
          _
      $region32: #{tpu_custom_call.1} parent=5 // pred_fallthru
        _
      %p364 = scmp.le.s32.totalorder 1, %s24
      %p365 = scmp.lt.s32.totalorder %s24, 3
      %p366 = pnand %p364, %p365
      %p367 = pneg %p366
      // Predicated region
      $region45: #{tpu_custom_call.1} parent=5 // pred_check
        _
      $region46: #{tpu_custom_call.1} parent=5 // pred_check_branch
        %369 = sbr.rel (%p366) target = $region48
      $region47: #{tpu_custom_call.1} parent=5 // pred_region
        %s370 = ssub.s32 %s24, 1
        %s371 = sand.u32 %s51, 1
        %s372 = scalar_lea.sflag [#allocation3], %s371
        %s373 = sand.u32 %s51, 1
        %s374 = smul.addr %s373, 16
        %s375 = scalar_lea.vmem [#allocation2], %s374
        // Predicated region
        $region49: #{tpu_custom_call.1} parent=47 // pred_check
          %p376 = pneg %p64
        $region50: #{tpu_custom_call.1} parent=47 // pred_check_branch
          %378 = sbr.rel (%p376) target = $region52
        $region51: #{tpu_custom_call.1} parent=47 // pred_region
          %379 = dma.done %s372, 256
        $region52: #{tpu_custom_call.1} parent=47 // pred_fallthru
          _
        %s380 = sand.u32 %s29, 1
        %s381 = scalar_lea.sflag [#allocation6], %s380
        %s382 = sand.u32 %s77, 1
        %s383 = smul.addr %s382, 16
        %s384 = scalar_lea.vmem [#allocation5], %s383
        // Predicated region
        $region53: #{tpu_custom_call.1} parent=47 // pred_check
          %p385 = pneg %p90
        $region54: #{tpu_custom_call.1} parent=47 // pred_check_branch
          %387 = sbr.rel (%p385) target = $region56
        $region55: #{tpu_custom_call.1} parent=47 // pred_region
          %388 = dma.done %s381, 256
        $region56: #{tpu_custom_call.1} parent=47 // pred_fallthru
          _
        %s389 = sand.u32 %s29, 1
        %s390 = scalar_lea.sflag [#allocation6], %s389
        %s391 = sand.u32 %s103, 1
        %s392 = smul.addr %s391, 16
        %s393 = scalar_lea.vmem [#allocation7], %s392
        // Predicated region
        $region57: #{tpu_custom_call.1} parent=47 // pred_check
          %p394 = pneg %p116
        $region58: #{tpu_custom_call.1} parent=47 // pred_check_branch
          %396 = sbr.rel (%p394) target = $region60
        $region59: #{tpu_custom_call.1} parent=47 // pred_region
          %397 = dma.done %s390, 256
        $region60: #{tpu_custom_call.1} parent=47 // pred_fallthru
          _
        // Predicated region
        $region61: #{tpu_custom_call.1} parent=47 // pred_check
          %p398 = pneg %p137
        $region62: #{tpu_custom_call.1} parent=47 // pred_check_branch
          %400 = sbr.rel (%p398) target = $region64
        $region63: #{tpu_custom_call.1} parent=47 // pred_region
          %401 = dma.done [#allocation9], 2048
        $region64: #{tpu_custom_call.1} parent=47 // pred_fallthru
          _
        // Predicated region
        $region65: #{tpu_custom_call.1} parent=47 // pred_check
          %p402 = pneg %p158
        $region66: #{tpu_custom_call.1} parent=47 // pred_check_branch
          %404 = sbr.rel (%p402) target = $region68
        $region67: #{tpu_custom_call.1} parent=47 // pred_region
          %405 = dma.done [#allocation9], 2048
        $region68: #{tpu_custom_call.1} parent=47 // pred_fallthru
          _
        // Predicated region
        $region69: #{tpu_custom_call.1} parent=47 // pred_check
          %p406 = pneg %p179
        $region70: #{tpu_custom_call.1} parent=47 // pred_check_branch
          %408 = sbr.rel (%p406) target = $region72
        $region71: #{tpu_custom_call.1} parent=47 // pred_region
          %409 = dma.done [#allocation12], 2048
        $region72: #{tpu_custom_call.1} parent=47 // pred_fallthru
          _
        // Predicated region
        $region73: #{tpu_custom_call.1} parent=47 // pred_check
          %p410 = pneg %p200
        $region74: #{tpu_custom_call.1} parent=47 // pred_check_branch
          %412 = sbr.rel (%p410) target = $region76
        $region75: #{tpu_custom_call.1} parent=47 // pred_region
          %413 = dma.done [#allocation12], 2048
        $region76: #{tpu_custom_call.1} parent=47 // pred_fallthru
          _
        %s414 = sand.u32 %s51, 1
        %s415 = scalar_lea.sflag [#allocation3], %s414
        %s416 = sand.u32 %s51, 1
        %s417 = smul.addr %s416, 16
        %s418 = scalar_lea.vmem [#allocation2], %s417
        %p419 = pneg %p64
        %p420 = pneg %p61
        %s421 = sand.u32 %s29, 1
        %s422 = scalar_lea.sflag [#allocation6], %s421
        %s423 = sand.u32 %s77, 1
        %s424 = smul.addr %s423, 16
        %s425 = scalar_lea.vmem [#allocation5], %s424
        %p426 = pneg %p90
        %p427 = pneg %p87
        %s428 = sand.u32 %s29, 1
        %s429 = scalar_lea.sflag [#allocation6], %s428
        %s430 = sand.u32 %s103, 1
        %s431 = smul.addr %s430, 16
        %s432 = scalar_lea.vmem [#allocation7], %s431
        %p433 = pneg %p116
        %p434 = pneg %p113
        %p435 = pneg %p137
        %p436 = pneg %p134
        %p437 = pneg %p158
        %p438 = pneg %p155
        %p439 = pneg %p179
        %p440 = pneg %p176
        %p441 = pneg %p200
        %p442 = pneg %p197
        %p443 = pneg %p228
        %p444 = pneg %p225
        %s445 = sand.u32 %s215, 1
        %s446 = scalar_lea.sflag [#allocation4], %s445
        %s447 = sand.u32 %s215, 1
        %s448 = smul.addr %s447, 16
        %s449 = scalar_lea.vmem [#allocation14], %s448
        %s450 = smul.u32 2, %s34
        %s451 = smul.u32 2, %s34
        %v452 = vld [vmem:[%s375] sm:$0xff]
        %v453 = vld [vmem:[%s375 + $0x8] sm:$0xff]
        %v454 = vld [vmem:[%s384] sm:$0xff]
        %v455 = vld [vmem:[%s384 + $0x8] sm:$0xff]
        %v456 = vld [vmem:[%s393] sm:$0xff]
        %v457 = vld [vmem:[%s393 + $0x8] sm:$0xff]
        %v458 = vld [vmem:[#allocation8] sm:$0xff]
        %v459 = vld [vmem:[#allocation8 + $0x8] sm:$0xff]
        %v460 = vld [vmem:[#allocation8 + $0x10] sm:$0xff]
        %v461 = vld [vmem:[#allocation8 + $0x18] sm:$0xff]
        %v462 = vld [vmem:[#allocation8 + $0x20] sm:$0xff]
        %v463 = vld [vmem:[#allocation8 + $0x28] sm:$0xff]
        %v464 = vld [vmem:[#allocation8 + $0x30] sm:$0xff]
        %v465 = vld [vmem:[#allocation8 + $0x38] sm:$0xff]
        %v466 = vld [vmem:[#allocation8 + $0x40] sm:$0xff]
        %v467 = vld [vmem:[#allocation8 + $0x48] sm:$0xff]
        %v468 = vld [vmem:[#allocation8 + $0x50] sm:$0xff]
        %v469 = vld [vmem:[#allocation8 + $0x58] sm:$0xff]
        %v470 = vld [vmem:[#allocation8 + $0x60] sm:$0xff]
        %v471 = vld [vmem:[#allocation8 + $0x68] sm:$0xff]
        %v472 = vld [vmem:[#allocation8 + $0x70] sm:$0xff]
        %v473 = vld [vmem:[#allocation8 + $0x78] sm:$0xff]
        %474 = vmatprep.subr.mxu0 0.0
        %475 = vmatpush1.msra.mxu0 %v458
        %476 = vmatprep.subr.mxu0 0.0
        %477 = vmatpush1.msra.mxu0 %v459
        %478 = vmatprep.subr.mxu0 0.0
        %479 = vmatpush1.msra.mxu0 %v460
        %480 = vmatprep.subr.mxu0 0.0
        %481 = vmatpush1.msra.mxu0 %v461
        %482 = vmatprep.subr.mxu0 0.0
        %483 = vmatpush1.msra.mxu0 %v462
        %484 = vmatprep.subr.mxu0 0.0
        %485 = vmatpush1.msra.mxu0 %v463
        %486 = vmatprep.subr.mxu0 0.0
        %487 = vmatpush1.msra.mxu0 %v464
        %488 = vmatprep.subr.mxu0 0.0
        %489 = vmatpush1.msra.mxu0 %v465
        %490 = vmatprep.subr.mxu0 0.0
        %491 = vmatpush1.msra.mxu0 %v466
        %492 = vmatprep.subr.mxu0 0.0
        %493 = vmatpush1.msra.mxu0 %v467
        %494 = vmatprep.subr.mxu0 0.0
        %495 = vmatpush1.msra.mxu0 %v468
        %496 = vmatprep.subr.mxu0 0.0
        %497 = vmatpush1.msra.mxu0 %v469
        %498 = vmatprep.subr.mxu0 0.0
        %499 = vmatpush1.msra.mxu0 %v470
        %500 = vmatprep.subr.mxu0 0.0
        %501 = vmatpush1.msra.mxu0 %v471
        %502 = vmatprep.subr.mxu0 0.0
        %503 = vmatpush1.msra.mxu0 %v472
        %504 = vmatprep.subr.mxu0 0.0
        %505 = vmatpush1.msra.mxu0 %v473
        %506 = vmatprep.subr.mxu0 0.0
        %507 = vmatpush1.msra.mxu0 0.0
        %508 = vmatprep.subr.mxu0 0.0
        %509 = vmatpush1.msra.mxu0 0.0
        %510 = vmatprep.subr.mxu0 0.0
        %511 = vmatpush1.msra.mxu0 0.0
        %512 = vmatprep.subr.mxu0 0.0
        %513 = vmatpush1.msra.mxu0 0.0
        %514 = vmatprep.subr.mxu0 0.0
        %515 = vmatpush1.msra.mxu0 0.0
        %516 = vmatprep.subr.mxu0 0.0
        %517 = vmatpush1.msra.mxu0 0.0
        %518 = vmatprep.subr.mxu0 0.0
        %519 = vmatpush1.msra.mxu0 0.0
        %520 = vmatprep.subr.mxu0 0.0
        %521 = vmatpush1.msra.mxu0 0.0
        %522 = vmatprep.subr.mxu0 0.0
        %523 = vmatpush1.msra.mxu0 0.0
        %524 = vmatprep.subr.mxu0 0.0
        %525 = vmatpush1.msra.mxu0 0.0
        %526 = vmatprep.subr.mxu0 0.0
        %527 = vmatpush1.msra.mxu0 0.0
        %528 = vmatprep.subr.mxu0 0.0
        %529 = vmatpush1.msra.mxu0 0.0
        %530 = vmatprep.subr.mxu0 0.0
        %531 = vmatpush1.msra.mxu0 0.0
        %532 = vmatprep.subr.mxu0 0.0
        %533 = vmatpush1.msra.mxu0 0.0
        %534 = vmatprep.subr.mxu0 0.0
        %535 = vmatpush1.msra.mxu0 0.0
        %536 = vmatprep.subr.mxu0 0.0
        %537 = vmatpush1.msra.mxu0 0.0
        %538 = vmatprep.mubr.f32.mxu0 0.0
        %539 = vmatmul.mubr.f32.gmra.mrb[0].mxu0 %v452
        %v540 = vpop.f32.mrb[0].mxu0
        %v541 = vadd.f32 0.0, %v540
        %v542 = vpop.f32.mrb[0].mxu0
        %543 = vmatprep.mubr.f32.mxu0 0.0
        %544 = vmatmul.mubr.f32.gmra.mrb[0].mxu0 %v453
        %v545 = vpop.f32.mrb[0].mxu0
        %v546 = vadd.f32 0.0, %v545
        %v547 = vpop.f32.mrb[0].mxu0
        %548 = vdwg.mxu0
        %v549 = vld [vmem:[#allocation10] sm:$0xff]
        %v550 = vld [vmem:[#allocation10 + $0x8] sm:$0xff]
        %v551 = vld [vmem:[#allocation10 + $0x10] sm:$0xff]
        %v552 = vld [vmem:[#allocation10 + $0x18] sm:$0xff]
        %v553 = vld [vmem:[#allocation10 + $0x20] sm:$0xff]
        %v554 = vld [vmem:[#allocation10 + $0x28] sm:$0xff]
        %v555 = vld [vmem:[#allocation10 + $0x30] sm:$0xff]
        %v556 = vld [vmem:[#allocation10 + $0x38] sm:$0xff]
        %v557 = vld [vmem:[#allocation10 + $0x40] sm:$0xff]
        %v558 = vld [vmem:[#allocation10 + $0x48] sm:$0xff]
        %v559 = vld [vmem:[#allocation10 + $0x50] sm:$0xff]
        %v560 = vld [vmem:[#allocation10 + $0x58] sm:$0xff]
        %v561 = vld [vmem:[#allocation10 + $0x60] sm:$0xff]
        %v562 = vld [vmem:[#allocation10 + $0x68] sm:$0xff]
        %v563 = vld [vmem:[#allocation10 + $0x70] sm:$0xff]
        %v564 = vld [vmem:[#allocation10 + $0x78] sm:$0xff]
        %565 = vmatprep.subr.mxu0 0.0
        %566 = vmatpush1.msra.mxu0 %v549
        %567 = vmatprep.subr.mxu0 0.0
        %568 = vmatpush1.msra.mxu0 %v550
        %569 = vmatprep.subr.mxu0 0.0
        %570 = vmatpush1.msra.mxu0 %v551
        %571 = vmatprep.subr.mxu0 0.0
        %572 = vmatpush1.msra.mxu0 %v552
        %573 = vmatprep.subr.mxu0 0.0
        %574 = vmatpush1.msra.mxu0 %v553
        %575 = vmatprep.subr.mxu0 0.0
        %576 = vmatpush1.msra.mxu0 %v554
        %577 = vmatprep.subr.mxu0 0.0
        %578 = vmatpush1.msra.mxu0 %v555
        %579 = vmatprep.subr.mxu0 0.0
        %580 = vmatpush1.msra.mxu0 %v556
        %581 = vmatprep.subr.mxu0 0.0
        %582 = vmatpush1.msra.mxu0 %v557
        %583 = vmatprep.subr.mxu0 0.0
        %584 = vmatpush1.msra.mxu0 %v558
        %585 = vmatprep.subr.mxu0 0.0
        %586 = vmatpush1.msra.mxu0 %v559
        %587 = vmatprep.subr.mxu0 0.0
        %588 = vmatpush1.msra.mxu0 %v560
        %589 = vmatprep.subr.mxu0 0.0
        %590 = vmatpush1.msra.mxu0 %v561
        %591 = vmatprep.subr.mxu0 0.0
        %592 = vmatpush1.msra.mxu0 %v562
        %593 = vmatprep.subr.mxu0 0.0
        %594 = vmatpush1.msra.mxu0 %v563
        %595 = vmatprep.subr.mxu0 0.0
        %596 = vmatpush1.msra.mxu0 %v564
        %597 = vmatprep.subr.mxu0 0.0
        %598 = vmatpush1.msra.mxu0 0.0
        %599 = vmatprep.subr.mxu0 0.0
        %600 = vmatpush1.msra.mxu0 0.0
        %601 = vmatprep.subr.mxu0 0.0
        %602 = vmatpush1.msra.mxu0 0.0
        %603 = vmatprep.subr.mxu0 0.0
        %604 = vmatpush1.msra.mxu0 0.0
        %605 = vmatprep.subr.mxu0 0.0
        %606 = vmatpush1.msra.mxu0 0.0
        %607 = vmatprep.subr.mxu0 0.0
        %608 = vmatpush1.msra.mxu0 0.0
        %609 = vmatprep.subr.mxu0 0.0
        %610 = vmatpush1.msra.mxu0 0.0
        %611 = vmatprep.subr.mxu0 0.0
        %612 = vmatpush1.msra.mxu0 0.0
        %613 = vmatprep.subr.mxu0 0.0
        %614 = vmatpush1.msra.mxu0 0.0
        %615 = vmatprep.subr.mxu0 0.0
        %616 = vmatpush1.msra.mxu0 0.0
        %617 = vmatprep.subr.mxu0 0.0
        %618 = vmatpush1.msra.mxu0 0.0
        %619 = vmatprep.subr.mxu0 0.0
        %620 = vmatpush1.msra.mxu0 0.0
        %621 = vmatprep.subr.mxu0 0.0
        %622 = vmatpush1.msra.mxu0 0.0
        %623 = vmatprep.subr.mxu0 0.0
        %624 = vmatpush1.msra.mxu0 0.0
        %625 = vmatprep.subr.mxu0 0.0
        %626 = vmatpush1.msra.mxu0 0.0
        %627 = vmatprep.subr.mxu0 0.0
        %628 = vmatpush1.msra.mxu0 0.0
        %629 = vmatprep.mubr.f32.mxu0 0.0
        %630 = vmatmul.mubr.f32.gmra.mrb[0].mxu0 %v454
        %v631 = vpop.f32.mrb[0].mxu0
        %v632 = vadd.f32 0.0, %v631
        %v633 = vpop.f32.mrb[0].mxu0
        %634 = vmatprep.mubr.f32.mxu0 0.0
        %635 = vmatmul.mubr.f32.gmra.mrb[0].mxu0 %v455
        %v636 = vpop.f32.mrb[0].mxu0
        %v637 = vadd.f32 0.0, %v636
        %v638 = vpop.f32.mrb[0].mxu0
        %639 = vdwg.mxu0
        %v640 = vld [vmem:[#allocation11] sm:$0xff]
        %v641 = vld [vmem:[#allocation11 + $0x8] sm:$0xff]
        %v642 = vld [vmem:[#allocation11 + $0x10] sm:$0xff]
        %v643 = vld [vmem:[#allocation11 + $0x18] sm:$0xff]
        %v644 = vld [vmem:[#allocation11 + $0x20] sm:$0xff]
        %v645 = vld [vmem:[#allocation11 + $0x28] sm:$0xff]
        %v646 = vld [vmem:[#allocation11 + $0x30] sm:$0xff]
        %v647 = vld [vmem:[#allocation11 + $0x38] sm:$0xff]
        %v648 = vld [vmem:[#allocation11 + $0x40] sm:$0xff]
        %v649 = vld [vmem:[#allocation11 + $0x48] sm:$0xff]
        %v650 = vld [vmem:[#allocation11 + $0x50] sm:$0xff]
        %v651 = vld [vmem:[#allocation11 + $0x58] sm:$0xff]
        %v652 = vld [vmem:[#allocation11 + $0x60] sm:$0xff]
        %v653 = vld [vmem:[#allocation11 + $0x68] sm:$0xff]
        %v654 = vld [vmem:[#allocation11 + $0x70] sm:$0xff]
        %v655 = vld [vmem:[#allocation11 + $0x78] sm:$0xff]
        %656 = vmatprep.subr.mxu0 0.0
        %657 = vmatpush1.msra.mxu0 %v640
        %658 = vmatprep.subr.mxu0 0.0
        %659 = vmatpush1.msra.mxu0 %v641
        %660 = vmatprep.subr.mxu0 0.0
        %661 = vmatpush1.msra.mxu0 %v642
        %662 = vmatprep.subr.mxu0 0.0
        %663 = vmatpush1.msra.mxu0 %v643
        %664 = vmatprep.subr.mxu0 0.0
        %665 = vmatpush1.msra.mxu0 %v644
        %666 = vmatprep.subr.mxu0 0.0
        %667 = vmatpush1.msra.mxu0 %v645
        %668 = vmatprep.subr.mxu0 0.0
        %669 = vmatpush1.msra.mxu0 %v646
        %670 = vmatprep.subr.mxu0 0.0
        %671 = vmatpush1.msra.mxu0 %v647
        %672 = vmatprep.subr.mxu0 0.0
        %673 = vmatpush1.msra.mxu0 %v648
        %674 = vmatprep.subr.mxu0 0.0
        %675 = vmatpush1.msra.mxu0 %v649
        %676 = vmatprep.subr.mxu0 0.0
        %677 = vmatpush1.msra.mxu0 %v650
        %678 = vmatprep.subr.mxu0 0.0
        %679 = vmatpush1.msra.mxu0 %v651
        %680 = vmatprep.subr.mxu0 0.0
        %681 = vmatpush1.msra.mxu0 %v652
        %682 = vmatprep.subr.mxu0 0.0
        %683 = vmatpush1.msra.mxu0 %v653
        %684 = vmatprep.subr.mxu0 0.0
        %685 = vmatpush1.msra.mxu0 %v654
        %686 = vmatprep.subr.mxu0 0.0
        %687 = vmatpush1.msra.mxu0 %v655
        %688 = vmatprep.subr.mxu0 0.0
        %689 = vmatpush1.msra.mxu0 0.0
        %690 = vmatprep.subr.mxu0 0.0
        %691 = vmatpush1.msra.mxu0 0.0
        %692 = vmatprep.subr.mxu0 0.0
        %693 = vmatpush1.msra.mxu0 0.0
        %694 = vmatprep.subr.mxu0 0.0
        %695 = vmatpush1.msra.mxu0 0.0
        %696 = vmatprep.subr.mxu0 0.0
        %697 = vmatpush1.msra.mxu0 0.0
        %698 = vmatprep.subr.mxu0 0.0
        %699 = vmatpush1.msra.mxu0 0.0
        %700 = vmatprep.subr.mxu0 0.0
        %701 = vmatpush1.msra.mxu0 0.0
        %702 = vmatprep.subr.mxu0 0.0
        %703 = vmatpush1.msra.mxu0 0.0
        %704 = vmatprep.subr.mxu0 0.0
        %705 = vmatpush1.msra.mxu0 0.0
        %706 = vmatprep.subr.mxu0 0.0
        %707 = vmatpush1.msra.mxu0 0.0
        %708 = vmatprep.subr.mxu0 0.0
        %709 = vmatpush1.msra.mxu0 0.0
        %710 = vmatprep.subr.mxu0 0.0
        %711 = vmatpush1.msra.mxu0 0.0
        %712 = vmatprep.subr.mxu0 0.0
        %713 = vmatpush1.msra.mxu0 0.0
        %714 = vmatprep.subr.mxu0 0.0
        %715 = vmatpush1.msra.mxu0 0.0
        %716 = vmatprep.subr.mxu0 0.0
        %717 = vmatpush1.msra.mxu0 0.0
        %718 = vmatprep.subr.mxu0 0.0
        %719 = vmatpush1.msra.mxu0 0.0
        %720 = vmatprep.mubr.f32.mxu0 0.0
        %721 = vmatmul.mubr.f32.gmra.mrb[0].mxu0 %v456
        %v722 = vpop.f32.mrb[0].mxu0
        %v723 = vadd.f32 0.0, %v722
        %v724 = vpop.f32.mrb[0].mxu0
        %725 = vmatprep.mubr.f32.mxu0 0.0
        %726 = vmatmul.mubr.f32.gmra.mrb[0].mxu0 %v457
        %v727 = vpop.f32.mrb[0].mxu0
        %v728 = vadd.f32 0.0, %v727
        %v729 = vpop.f32.mrb[0].mxu0
        %730 = vdwg.mxu0
        %vm731 = vcmask 261120
        %v733 = vsel %vm731, %v541, 0
        %v736 = vsel %vm731, %v546, 0
        %v739 = vsel %vm731, %v632, 0
        %v742 = vsel %vm731, %v637, 0
        %744 = vmatprep.subr.mxu0 0.0
        %745 = vmatpush1.xpose.msra.mxu0 %v739
        %746 = vmatprep.subr.mxu0 0.0
        %747 = vmatpush1.xpose.msra.mxu0 %v742
        %748 = vmatprep.subr.mxu0 0.0
        %749 = vmatpush1.xpose.msra.mxu0 0.0
        %750 = vmatprep.subr.mxu0 0.0
        %751 = vmatpush1.xpose.msra.mxu0 0.0
        %752 = vmatprep.subr.mxu0 0.0
        %753 = vmatpush1.xpose.msra.mxu0 0.0
        %754 = vmatprep.subr.mxu0 0.0
        %755 = vmatpush1.xpose.msra.mxu0 0.0
        %756 = vmatprep.subr.mxu0 0.0
        %757 = vmatpush1.xpose.msra.mxu0 0.0
        %758 = vmatprep.subr.mxu0 0.0
        %759 = vmatpush1.xpose.msra.mxu0 0.0
        %760 = vmatprep.subr.mxu0 0.0
        %761 = vmatpush1.xpose.msra.mxu0 0.0
        %762 = vmatprep.subr.mxu0 0.0
        %763 = vmatpush1.xpose.msra.mxu0 0.0
        %764 = vmatprep.subr.mxu0 0.0
        %765 = vmatpush1.xpose.msra.mxu0 0.0
        %766 = vmatprep.subr.mxu0 0.0
        %767 = vmatpush1.xpose.msra.mxu0 0.0
        %768 = vmatprep.subr.mxu0 0.0
        %769 = vmatpush1.xpose.msra.mxu0 0.0
        %770 = vmatprep.subr.mxu0 0.0
        %771 = vmatpush1.xpose.msra.mxu0 0.0
        %772 = vmatprep.subr.mxu0 0.0
        %773 = vmatpush1.xpose.msra.mxu0 0.0
        %774 = vmatprep.subr.mxu0 0.0
        %775 = vmatpush1.xpose.msra.mxu0 0.0
        %776 = vmatprep.subr.mxu0 0.0
        %777 = vmatpush1.xpose.msra.mxu0 0.0
        %778 = vmatprep.subr.mxu0 0.0
        %779 = vmatpush1.xpose.msra.mxu0 0.0
        %780 = vmatprep.subr.mxu0 0.0
        %781 = vmatpush1.xpose.msra.mxu0 0.0
        %782 = vmatprep.subr.mxu0 0.0
        %783 = vmatpush1.xpose.msra.mxu0 0.0
        %784 = vmatprep.subr.mxu0 0.0
        %785 = vmatpush1.xpose.msra.mxu0 0.0
        %786 = vmatprep.subr.mxu0 0.0
        %787 = vmatpush1.xpose.msra.mxu0 0.0
        %788 = vmatprep.subr.mxu0 0.0
        %789 = vmatpush1.xpose.msra.mxu0 0.0
        %790 = vmatprep.subr.mxu0 0.0
        %791 = vmatpush1.xpose.msra.mxu0 0.0
        %792 = vmatprep.subr.mxu0 0.0
        %793 = vmatpush1.xpose.msra.mxu0 0.0
        %794 = vmatprep.subr.mxu0 0.0
        %795 = vmatpush1.xpose.msra.mxu0 0.0
        %796 = vmatprep.subr.mxu0 0.0
        %797 = vmatpush1.xpose.msra.mxu0 0.0
        %798 = vmatprep.subr.mxu0 0.0
        %799 = vmatpush1.xpose.msra.mxu0 0.0
        %800 = vmatprep.subr.mxu0 0.0
        %801 = vmatpush1.xpose.msra.mxu0 0.0
        %802 = vmatprep.subr.mxu0 0.0
        %803 = vmatpush1.xpose.msra.mxu0 0.0
        %804 = vmatprep.subr.mxu0 0.0
        %805 = vmatpush1.xpose.msra.mxu0 0.0
        %806 = vmatprep.subr.mxu0 0.0
        %807 = vmatpush1.xpose.msra.mxu0 0.0
        %808 = vmatprep.mubr.f32.mxu0 0.0
        %809 = vmatmul.mubr.f32.gmra.mrb[0].mxu0 %v733
        %v810 = vpop.f32.mrb[0].mxu0
        %v811 = vadd.f32 0.0, %v810
        %v812 = vpop.f32.mrb[0].mxu0
        %813 = vmatprep.mubr.f32.mxu0 0.0
        %814 = vmatmul.mubr.f32.gmra.mrb[0].mxu0 %v736
        %v815 = vpop.f32.mrb[0].mxu0
        %v816 = vadd.f32 0.0, %v815
        %v817 = vpop.f32.mrb[0].mxu0
        %818 = vdwg.mxu0
        %v819 = vmul.f32 %v811, 0.17677669
        %v820 = vmul.f32 %v816, 0.17677669
        %vm821 = vcmask 130048
        %v822 = vsel %vm821, %v819, -inf
        %823 = vmax.xlane.f32.xlu0 %v822
        %v824 = vpop.xlane.xlu0 %823
        %v825 = vsel %vm821, %v820, -inf
        %826 = vmax.xlane.f32.xlu0 %v825
        %v827 = vpop.xlane.xlu0 %826
        %v828 = vsub.f32 %v819, %v824
        %v829 = vsub.f32 %v820, %v827
        %v830 = vmul.f32 %v828, 1.442695
        %v831 = vpow.pop %v830
        %v832 = vmul.f32 %v829, 1.442695
        %v833 = vpow.pop %v832
        %v834 = vsel %vm821, %v831, 0.0
        %835 = vadd.xlane.f32.xlu0 %v834
        %v836 = vpop.xlane.xlu0 %835
        %v837 = vsel %vm821, %v833, 0.0
        %838 = vadd.xlane.f32.xlu0 %v837
        %v839 = vpop.xlane.xlu0 %838
        %v840 = vrcp.pop %v836
        %v841 = vrcp.pop %v839
        %v842 = vmul.f32 %v831, %v840
        %v843 = vmul.f32 %v833, %v841
        %v845 = vsel %vm821, %v842, 0
        %v848 = vsel %vm821, %v843, 0
        %850 = vmatprep.subr.mxu0 0.0
        %851 = vmatpush1.msra.mxu0 %v723
        %852 = vmatprep.subr.mxu0 0.0
        %853 = vmatpush1.msra.mxu0 %v728
        %854 = vmatprep.subr.mxu0 0.0
        %855 = vmatpush1.msra.mxu0 0.0
        %856 = vmatprep.subr.mxu0 0.0
        %857 = vmatpush1.msra.mxu0 0.0
        %858 = vmatprep.subr.mxu0 0.0
        %859 = vmatpush1.msra.mxu0 0.0
        %860 = vmatprep.subr.mxu0 0.0
        %861 = vmatpush1.msra.mxu0 0.0
        %862 = vmatprep.subr.mxu0 0.0
        %863 = vmatpush1.msra.mxu0 0.0
        %864 = vmatprep.subr.mxu0 0.0
        %865 = vmatpush1.msra.mxu0 0.0
        %866 = vmatprep.subr.mxu0 0.0
        %867 = vmatpush1.msra.mxu0 0.0
        %868 = vmatprep.subr.mxu0 0.0
        %869 = vmatpush1.msra.mxu0 0.0
        %870 = vmatprep.subr.mxu0 0.0
        %871 = vmatpush1.msra.mxu0 0.0
        %872 = vmatprep.subr.mxu0 0.0
        %873 = vmatpush1.msra.mxu0 0.0
        %874 = vmatprep.subr.mxu0 0.0
        %875 = vmatpush1.msra.mxu0 0.0
        %876 = vmatprep.subr.mxu0 0.0
        %877 = vmatpush1.msra.mxu0 0.0
        %878 = vmatprep.subr.mxu0 0.0
        %879 = vmatpush1.msra.mxu0 0.0
        %880 = vmatprep.subr.mxu0 0.0
        %881 = vmatpush1.msra.mxu0 0.0
        %882 = vmatprep.subr.mxu0 0.0
        %883 = vmatpush1.msra.mxu0 0.0
        %884 = vmatprep.subr.mxu0 0.0
        %885 = vmatpush1.msra.mxu0 0.0
        %886 = vmatprep.subr.mxu0 0.0
        %887 = vmatpush1.msra.mxu0 0.0
        %888 = vmatprep.subr.mxu0 0.0
        %889 = vmatpush1.msra.mxu0 0.0
        %890 = vmatprep.subr.mxu0 0.0
        %891 = vmatpush1.msra.mxu0 0.0
        %892 = vmatprep.subr.mxu0 0.0
        %893 = vmatpush1.msra.mxu0 0.0
        %894 = vmatprep.subr.mxu0 0.0
        %895 = vmatpush1.msra.mxu0 0.0
        %896 = vmatprep.subr.mxu0 0.0
        %897 = vmatpush1.msra.mxu0 0.0
        %898 = vmatprep.subr.mxu0 0.0
        %899 = vmatpush1.msra.mxu0 0.0
        %900 = vmatprep.subr.mxu0 0.0
        %901 = vmatpush1.msra.mxu0 0.0
        %902 = vmatprep.subr.mxu0 0.0
        %903 = vmatpush1.msra.mxu0 0.0
        %904 = vmatprep.subr.mxu0 0.0
        %905 = vmatpush1.msra.mxu0 0.0
        %906 = vmatprep.subr.mxu0 0.0
        %907 = vmatpush1.msra.mxu0 0.0
        %908 = vmatprep.subr.mxu0 0.0
        %909 = vmatpush1.msra.mxu0 0.0
        %910 = vmatprep.subr.mxu0 0.0
        %911 = vmatpush1.msra.mxu0 0.0
        %912 = vmatprep.subr.mxu0 0.0
        %913 = vmatpush1.msra.mxu0 0.0
        %914 = vmatprep.mubr.f32.mxu0 0.0
        %915 = vmatmul.mubr.f32.gmra.mrb[0].mxu0 %v845
        %v916 = vpop.f32.mrb[0].mxu0
        %v917 = vadd.f32 0.0, %v916
        %v918 = vpop.f32.mrb[0].mxu0
        %919 = vmatprep.mubr.f32.mxu0 0.0
        %920 = vmatmul.mubr.f32.gmra.mrb[0].mxu0 %v848
        %v921 = vpop.f32.mrb[0].mxu0
        %v922 = vadd.f32 0.0, %v921
        %v923 = vpop.f32.mrb[0].mxu0
        %924 = vdwg.mxu0
        %925 = vrot.lane.b32.xlu0 %v541, 96
        %v926 = vpop.permute.xlu0 %925
        %927 = vrot.lane.b32.xlu0 %v546, 96
        %v928 = vpop.permute.xlu0 %927
        %929 = vrot.lane.b32.xlu0 %v632, 96
        %v930 = vpop.permute.xlu0 %929
        %931 = vrot.lane.b32.xlu0 %v637, 96
        %v932 = vpop.permute.xlu0 %931
        %v933 = vsel %vm731, %v926, 0
        %v935 = vsel %vm731, %v928, 0
        %v937 = vsel %vm731, %v930, 0
        %v939 = vsel %vm731, %v932, 0
        %941 = vmatprep.subr.mxu0 0.0
        %942 = vmatpush1.xpose.msra.mxu0 %v937
        %943 = vmatprep.subr.mxu0 0.0
        %944 = vmatpush1.xpose.msra.mxu0 %v939
        %945 = vmatprep.subr.mxu0 0.0
        %946 = vmatpush1.xpose.msra.mxu0 0.0
        %947 = vmatprep.subr.mxu0 0.0
        %948 = vmatpush1.xpose.msra.mxu0 0.0
        %949 = vmatprep.subr.mxu0 0.0
        %950 = vmatpush1.xpose.msra.mxu0 0.0
        %951 = vmatprep.subr.mxu0 0.0
        %952 = vmatpush1.xpose.msra.mxu0 0.0
        %953 = vmatprep.subr.mxu0 0.0
        %954 = vmatpush1.xpose.msra.mxu0 0.0
        %955 = vmatprep.subr.mxu0 0.0
        %956 = vmatpush1.xpose.msra.mxu0 0.0
        %957 = vmatprep.subr.mxu0 0.0
        %958 = vmatpush1.xpose.msra.mxu0 0.0
        %959 = vmatprep.subr.mxu0 0.0
        %960 = vmatpush1.xpose.msra.mxu0 0.0
        %961 = vmatprep.subr.mxu0 0.0
        %962 = vmatpush1.xpose.msra.mxu0 0.0
        %963 = vmatprep.subr.mxu0 0.0
        %964 = vmatpush1.xpose.msra.mxu0 0.0
        %965 = vmatprep.subr.mxu0 0.0
        %966 = vmatpush1.xpose.msra.mxu0 0.0
        %967 = vmatprep.subr.mxu0 0.0
        %968 = vmatpush1.xpose.msra.mxu0 0.0
        %969 = vmatprep.subr.mxu0 0.0
        %970 = vmatpush1.xpose.msra.mxu0 0.0
        %971 = vmatprep.subr.mxu0 0.0
        %972 = vmatpush1.xpose.msra.mxu0 0.0
        %973 = vmatprep.subr.mxu0 0.0
        %974 = vmatpush1.xpose.msra.mxu0 0.0
        %975 = vmatprep.subr.mxu0 0.0
        %976 = vmatpush1.xpose.msra.mxu0 0.0
        %977 = vmatprep.subr.mxu0 0.0
        %978 = vmatpush1.xpose.msra.mxu0 0.0
        %979 = vmatprep.subr.mxu0 0.0
        %980 = vmatpush1.xpose.msra.mxu0 0.0
        %981 = vmatprep.subr.mxu0 0.0
        %982 = vmatpush1.xpose.msra.mxu0 0.0
        %983 = vmatprep.subr.mxu0 0.0
        %984 = vmatpush1.xpose.msra.mxu0 0.0
        %985 = vmatprep.subr.mxu0 0.0
        %986 = vmatpush1.xpose.msra.mxu0 0.0
        %987 = vmatprep.subr.mxu0 0.0
        %988 = vmatpush1.xpose.msra.mxu0 0.0
        %989 = vmatprep.subr.mxu0 0.0
        %990 = vmatpush1.xpose.msra.mxu0 0.0
        %991 = vmatprep.subr.mxu0 0.0
        %992 = vmatpush1.xpose.msra.mxu0 0.0
        %993 = vmatprep.subr.mxu0 0.0
        %994 = vmatpush1.xpose.msra.mxu0 0.0
        %995 = vmatprep.subr.mxu0 0.0
        %996 = vmatpush1.xpose.msra.mxu0 0.0
        %997 = vmatprep.subr.mxu0 0.0
        %998 = vmatpush1.xpose.msra.mxu0 0.0
        %999 = vmatprep.subr.mxu0 0.0
        %1000 = vmatpush1.xpose.msra.mxu0 0.0
        %1001 = vmatprep.subr.mxu0 0.0
        %1002 = vmatpush1.xpose.msra.mxu0 0.0
        %1003 = vmatprep.subr.mxu0 0.0
        %1004 = vmatpush1.xpose.msra.mxu0 0.0
        %1005 = vmatprep.mubr.f32.mxu0 0.0
        %1006 = vmatmul.mubr.f32.gmra.mrb[0].mxu0 %v933
        %v1007 = vpop.f32.mrb[0].mxu0
        %v1008 = vadd.f32 0.0, %v1007
        %v1009 = vpop.f32.mrb[0].mxu0
        %1010 = vmatprep.mubr.f32.mxu0 0.0
        %1011 = vmatmul.mubr.f32.gmra.mrb[0].mxu0 %v935
        %v1012 = vpop.f32.mrb[0].mxu0
        %v1013 = vadd.f32 0.0, %v1012
        %v1014 = vpop.f32.mrb[0].mxu0
        %1015 = vdwg.mxu0
        %v1016 = vmul.f32 %v1008, 0.17677669
        %v1017 = vmul.f32 %v1013, 0.17677669
        %v1018 = vsel %vm821, %v1016, -inf
        %1019 = vmax.xlane.f32.xlu0 %v1018
        %v1020 = vpop.xlane.xlu0 %1019
        %v1021 = vsel %vm821, %v1017, -inf
        %1022 = vmax.xlane.f32.xlu0 %v1021
        %v1023 = vpop.xlane.xlu0 %1022
        %v1024 = vsub.f32 %v1016, %v1020
        %v1025 = vsub.f32 %v1017, %v1023
        %v1026 = vmul.f32 %v1024, 1.442695
        %v1027 = vpow.pop %v1026
        %v1028 = vmul.f32 %v1025, 1.442695
        %v1029 = vpow.pop %v1028
        %v1030 = vsel %vm821, %v1027, 0.0
        %1031 = vadd.xlane.f32.xlu0 %v1030
        %v1032 = vpop.xlane.xlu0 %1031
        %v1033 = vsel %vm821, %v1029, 0.0
        %1034 = vadd.xlane.f32.xlu0 %v1033
        %v1035 = vpop.xlane.xlu0 %1034
        %v1036 = vrcp.pop %v1032
        %v1037 = vrcp.pop %v1035
        %v1038 = vmul.f32 %v1027, %v1036
        %v1039 = vmul.f32 %v1029, %v1037
        %1042 = vrot.lane.b32.xlu0 %v723, 96
        %v1043 = vpop.permute.xlu0 %1042
        %1044 = vrot.lane.b32.xlu0 %v728, 96
        %v1045 = vpop.permute.xlu0 %1044
        %v1049 = vsel %vm821, %v1038, 0
        %v1052 = vsel %vm821, %v1039, 0
        %1054 = vmatprep.subr.mxu0 0.0
        %1055 = vmatpush1.msra.mxu0 %v1043
        %1056 = vmatprep.subr.mxu0 0.0
        %1057 = vmatpush1.msra.mxu0 %v1045
        %1058 = vmatprep.subr.mxu0 0.0
        %1059 = vmatpush1.msra.mxu0 0.0
        %1060 = vmatprep.subr.mxu0 0.0
        %1061 = vmatpush1.msra.mxu0 0.0
        %1062 = vmatprep.subr.mxu0 0.0
        %1063 = vmatpush1.msra.mxu0 0.0
        %1064 = vmatprep.subr.mxu0 0.0
        %1065 = vmatpush1.msra.mxu0 0.0
        %1066 = vmatprep.subr.mxu0 0.0
        %1067 = vmatpush1.msra.mxu0 0.0
        %1068 = vmatprep.subr.mxu0 0.0
        %1069 = vmatpush1.msra.mxu0 0.0
        %1070 = vmatprep.subr.mxu0 0.0
        %1071 = vmatpush1.msra.mxu0 0.0
        %1072 = vmatprep.subr.mxu0 0.0
        %1073 = vmatpush1.msra.mxu0 0.0
        %1074 = vmatprep.subr.mxu0 0.0
        %1075 = vmatpush1.msra.mxu0 0.0
        %1076 = vmatprep.subr.mxu0 0.0
        %1077 = vmatpush1.msra.mxu0 0.0
        %1078 = vmatprep.subr.mxu0 0.0
        %1079 = vmatpush1.msra.mxu0 0.0
        %1080 = vmatprep.subr.mxu0 0.0
        %1081 = vmatpush1.msra.mxu0 0.0
        %1082 = vmatprep.subr.mxu0 0.0
        %1083 = vmatpush1.msra.mxu0 0.0
        %1084 = vmatprep.subr.mxu0 0.0
        %1085 = vmatpush1.msra.mxu0 0.0
        %1086 = vmatprep.subr.mxu0 0.0
        %1087 = vmatpush1.msra.mxu0 0.0
        %1088 = vmatprep.subr.mxu0 0.0
        %1089 = vmatpush1.msra.mxu0 0.0
        %1090 = vmatprep.subr.mxu0 0.0
        %1091 = vmatpush1.msra.mxu0 0.0
        %1092 = vmatprep.subr.mxu0 0.0
        %1093 = vmatpush1.msra.mxu0 0.0
        %1094 = vmatprep.subr.mxu0 0.0
        %1095 = vmatpush1.msra.mxu0 0.0
        %1096 = vmatprep.subr.mxu0 0.0
        %1097 = vmatpush1.msra.mxu0 0.0
        %1098 = vmatprep.subr.mxu0 0.0
        %1099 = vmatpush1.msra.mxu0 0.0
        %1100 = vmatprep.subr.mxu0 0.0
        %1101 = vmatpush1.msra.mxu0 0.0
        %1102 = vmatprep.subr.mxu0 0.0
        %1103 = vmatpush1.msra.mxu0 0.0
        %1104 = vmatprep.subr.mxu0 0.0
        %1105 = vmatpush1.msra.mxu0 0.0
        %1106 = vmatprep.subr.mxu0 0.0
        %1107 = vmatpush1.msra.mxu0 0.0
        %1108 = vmatprep.subr.mxu0 0.0
        %1109 = vmatpush1.msra.mxu0 0.0
        %1110 = vmatprep.subr.mxu0 0.0
        %1111 = vmatpush1.msra.mxu0 0.0
        %1112 = vmatprep.subr.mxu0 0.0
        %1113 = vmatpush1.msra.mxu0 0.0
        %1114 = vmatprep.subr.mxu0 0.0
        %1115 = vmatpush1.msra.mxu0 0.0
        %1116 = vmatprep.subr.mxu0 0.0
        %1117 = vmatpush1.msra.mxu0 0.0
        %1118 = vmatprep.mubr.f32.mxu0 0.0
        %1119 = vmatmul.mubr.f32.gmra.mrb[0].mxu0 %v1049
        %v1120 = vpop.f32.mrb[0].mxu0
        %v1121 = vadd.f32 0.0, %v1120
        %v1122 = vpop.f32.mrb[0].mxu0
        %1123 = vmatprep.mubr.f32.mxu0 0.0
        %1124 = vmatmul.mubr.f32.gmra.mrb[0].mxu0 %v1052
        %v1125 = vpop.f32.mrb[0].mxu0
        %v1126 = vadd.f32 0.0, %v1125
        %v1127 = vpop.f32.mrb[0].mxu0
        %1128 = vdwg.mxu0
        %1129 = vrot.lane.b32.xlu0 %v541, 64
        %v1130 = vpop.permute.xlu0 %1129
        %1131 = vrot.lane.b32.xlu0 %v546, 64
        %v1132 = vpop.permute.xlu0 %1131
        %1133 = vrot.lane.b32.xlu0 %v632, 64
        %v1134 = vpop.permute.xlu0 %1133
        %1135 = vrot.lane.b32.xlu0 %v637, 64
        %v1136 = vpop.permute.xlu0 %1135
        %v1137 = vsel %vm731, %v1130, 0
        %v1139 = vsel %vm731, %v1132, 0
        %v1141 = vsel %vm731, %v1134, 0
        %v1143 = vsel %vm731, %v1136, 0
        %1145 = vmatprep.subr.mxu0 0.0
        %1146 = vmatpush1.xpose.msra.mxu0 %v1141
        %1147 = vmatprep.subr.mxu0 0.0
        %1148 = vmatpush1.xpose.msra.mxu0 %v1143
        %1149 = vmatprep.subr.mxu0 0.0
        %1150 = vmatpush1.xpose.msra.mxu0 0.0
        %1151 = vmatprep.subr.mxu0 0.0
        %1152 = vmatpush1.xpose.msra.mxu0 0.0
        %1153 = vmatprep.subr.mxu0 0.0
        %1154 = vmatpush1.xpose.msra.mxu0 0.0
        %1155 = vmatprep.subr.mxu0 0.0
        %1156 = vmatpush1.xpose.msra.mxu0 0.0
        %1157 = vmatprep.subr.mxu0 0.0
        %1158 = vmatpush1.xpose.msra.mxu0 0.0
        %1159 = vmatprep.subr.mxu0 0.0
        %1160 = vmatpush1.xpose.msra.mxu0 0.0
        %1161 = vmatprep.subr.mxu0 0.0
        %1162 = vmatpush1.xpose.msra.mxu0 0.0
        %1163 = vmatprep.subr.mxu0 0.0
        %1164 = vmatpush1.xpose.msra.mxu0 0.0
        %1165 = vmatprep.subr.mxu0 0.0
        %1166 = vmatpush1.xpose.msra.mxu0 0.0
        %1167 = vmatprep.subr.mxu0 0.0
        %1168 = vmatpush1.xpose.msra.mxu0 0.0
        %1169 = vmatprep.subr.mxu0 0.0
        %1170 = vmatpush1.xpose.msra.mxu0 0.0
        %1171 = vmatprep.subr.mxu0 0.0
        %1172 = vmatpush1.xpose.msra.mxu0 0.0
        %1173 = vmatprep.subr.mxu0 0.0
        %1174 = vmatpush1.xpose.msra.mxu0 0.0
        %1175 = vmatprep.subr.mxu0 0.0
        %1176 = vmatpush1.xpose.msra.mxu0 0.0
        %1177 = vmatprep.subr.mxu0 0.0
        %1178 = vmatpush1.xpose.msra.mxu0 0.0
        %1179 = vmatprep.subr.mxu0 0.0
        %1180 = vmatpush1.xpose.msra.mxu0 0.0
        %1181 = vmatprep.subr.mxu0 0.0
        %1182 = vmatpush1.xpose.msra.mxu0 0.0
        %1183 = vmatprep.subr.mxu0 0.0
        %1184 = vmatpush1.xpose.msra.mxu0 0.0
        %1185 = vmatprep.subr.mxu0 0.0
        %1186 = vmatpush1.xpose.msra.mxu0 0.0
        %1187 = vmatprep.subr.mxu0 0.0
        %1188 = vmatpush1.xpose.msra.mxu0 0.0
        %1189 = vmatprep.subr.mxu0 0.0
        %1190 = vmatpush1.xpose.msra.mxu0 0.0
        %1191 = vmatprep.subr.mxu0 0.0
        %1192 = vmatpush1.xpose.msra.mxu0 0.0
        %1193 = vmatprep.subr.mxu0 0.0
        %1194 = vmatpush1.xpose.msra.mxu0 0.0
        %1195 = vmatprep.subr.mxu0 0.0
        %1196 = vmatpush1.xpose.msra.mxu0 0.0
        %1197 = vmatprep.subr.mxu0 0.0
        %1198 = vmatpush1.xpose.msra.mxu0 0.0
        %1199 = vmatprep.subr.mxu0 0.0
        %1200 = vmatpush1.xpose.msra.mxu0 0.0
        %1201 = vmatprep.subr.mxu0 0.0
        %1202 = vmatpush1.xpose.msra.mxu0 0.0
        %1203 = vmatprep.subr.mxu0 0.0
        %1204 = vmatpush1.xpose.msra.mxu0 0.0
        %1205 = vmatprep.subr.mxu0 0.0
        %1206 = vmatpush1.xpose.msra.mxu0 0.0
        %1207 = vmatprep.subr.mxu0 0.0
        %1208 = vmatpush1.xpose.msra.mxu0 0.0
        %1209 = vmatprep.mubr.f32.mxu0 0.0
        %1210 = vmatmul.mubr.f32.gmra.mrb[0].mxu0 %v1137
        %v1211 = vpop.f32.mrb[0].mxu0
        %v1212 = vadd.f32 0.0, %v1211
        %v1213 = vpop.f32.mrb[0].mxu0
        %1214 = vmatprep.mubr.f32.mxu0 0.0
        %1215 = vmatmul.mubr.f32.gmra.mrb[0].mxu0 %v1139
        %v1216 = vpop.f32.mrb[0].mxu0
        %v1217 = vadd.f32 0.0, %v1216
        %v1218 = vpop.f32.mrb[0].mxu0
        %1219 = vdwg.mxu0
        %v1220 = vmul.f32 %v1212, 0.17677669
        %v1221 = vmul.f32 %v1217, 0.17677669
        %v1222 = vsel %vm821, %v1220, -inf
        %1223 = vmax.xlane.f32.xlu0 %v1222
        %v1224 = vpop.xlane.xlu0 %1223
        %v1225 = vsel %vm821, %v1221, -inf
        %1226 = vmax.xlane.f32.xlu0 %v1225
        %v1227 = vpop.xlane.xlu0 %1226
        %v1228 = vsub.f32 %v1220, %v1224
        %v1229 = vsub.f32 %v1221, %v1227
        %v1230 = vmul.f32 %v1228, 1.442695
        %v1231 = vpow.pop %v1230
        %v1232 = vmul.f32 %v1229, 1.442695
        %v1233 = vpow.pop %v1232
        %v1234 = vsel %vm821, %v1231, 0.0
        %1235 = vadd.xlane.f32.xlu0 %v1234
        %v1236 = vpop.xlane.xlu0 %1235
        %v1237 = vsel %vm821, %v1233, 0.0
        %1238 = vadd.xlane.f32.xlu0 %v1237
        %v1239 = vpop.xlane.xlu0 %1238
        %v1240 = vrcp.pop %v1236
        %v1241 = vrcp.pop %v1239
        %v1242 = vmul.f32 %v1231, %v1240
        %v1243 = vmul.f32 %v1233, %v1241
        %1244 = vrot.lane.b32.xlu0 %v723, 64
        %v1245 = vpop.permute.xlu0 %1244
        %1246 = vrot.lane.b32.xlu0 %v728, 64
        %v1247 = vpop.permute.xlu0 %1246
        %v1251 = vsel %vm821, %v1242, 0
        %v1254 = vsel %vm821, %v1243, 0
        %1256 = vmatprep.subr.mxu0 0.0
        %1257 = vmatpush1.msra.mxu0 %v1245
        %1258 = vmatprep.subr.mxu0 0.0
        %1259 = vmatpush1.msra.mxu0 %v1247
        %1260 = vmatprep.subr.mxu0 0.0
        %1261 = vmatpush1.msra.mxu0 0.0
        %1262 = vmatprep.subr.mxu0 0.0
        %1263 = vmatpush1.msra.mxu0 0.0
        %1264 = vmatprep.subr.mxu0 0.0
        %1265 = vmatpush1.msra.mxu0 0.0
        %1266 = vmatprep.subr.mxu0 0.0
        %1267 = vmatpush1.msra.mxu0 0.0
        %1268 = vmatprep.subr.mxu0 0.0
        %1269 = vmatpush1.msra.mxu0 0.0
        %1270 = vmatprep.subr.mxu0 0.0
        %1271 = vmatpush1.msra.mxu0 0.0
        %1272 = vmatprep.subr.mxu0 0.0
        %1273 = vmatpush1.msra.mxu0 0.0
        %1274 = vmatprep.subr.mxu0 0.0
        %1275 = vmatpush1.msra.mxu0 0.0
        %1276 = vmatprep.subr.mxu0 0.0
        %1277 = vmatpush1.msra.mxu0 0.0
        %1278 = vmatprep.subr.mxu0 0.0
        %1279 = vmatpush1.msra.mxu0 0.0
        %1280 = vmatprep.subr.mxu0 0.0
        %1281 = vmatpush1.msra.mxu0 0.0
        %1282 = vmatprep.subr.mxu0 0.0
        %1283 = vmatpush1.msra.mxu0 0.0
        %1284 = vmatprep.subr.mxu0 0.0
        %1285 = vmatpush1.msra.mxu0 0.0
        %1286 = vmatprep.subr.mxu0 0.0
        %1287 = vmatpush1.msra.mxu0 0.0
        %1288 = vmatprep.subr.mxu0 0.0
        %1289 = vmatpush1.msra.mxu0 0.0
        %1290 = vmatprep.subr.mxu0 0.0
        %1291 = vmatpush1.msra.mxu0 0.0
        %1292 = vmatprep.subr.mxu0 0.0
        %1293 = vmatpush1.msra.mxu0 0.0
        %1294 = vmatprep.subr.mxu0 0.0
        %1295 = vmatpush1.msra.mxu0 0.0
        %1296 = vmatprep.subr.mxu0 0.0
        %1297 = vmatpush1.msra.mxu0 0.0
        %1298 = vmatprep.subr.mxu0 0.0
        %1299 = vmatpush1.msra.mxu0 0.0
        %1300 = vmatprep.subr.mxu0 0.0
        %1301 = vmatpush1.msra.mxu0 0.0
        %1302 = vmatprep.subr.mxu0 0.0
        %1303 = vmatpush1.msra.mxu0 0.0
        %1304 = vmatprep.subr.mxu0 0.0
        %1305 = vmatpush1.msra.mxu0 0.0
        %1306 = vmatprep.subr.mxu0 0.0
        %1307 = vmatpush1.msra.mxu0 0.0
        %1308 = vmatprep.subr.mxu0 0.0
        %1309 = vmatpush1.msra.mxu0 0.0
        %1310 = vmatprep.subr.mxu0 0.0
        %1311 = vmatpush1.msra.mxu0 0.0
        %1312 = vmatprep.subr.mxu0 0.0
        %1313 = vmatpush1.msra.mxu0 0.0
        %1314 = vmatprep.subr.mxu0 0.0
        %1315 = vmatpush1.msra.mxu0 0.0
        %1316 = vmatprep.subr.mxu0 0.0
        %1317 = vmatpush1.msra.mxu0 0.0
        %1318 = vmatprep.subr.mxu0 0.0
        %1319 = vmatpush1.msra.mxu0 0.0
        %1320 = vmatprep.mubr.f32.mxu0 0.0
        %1321 = vmatmul.mubr.f32.gmra.mrb[0].mxu0 %v1251
        %v1322 = vpop.f32.mrb[0].mxu0
        %v1323 = vadd.f32 0.0, %v1322
        %v1324 = vpop.f32.mrb[0].mxu0
        %1325 = vmatprep.mubr.f32.mxu0 0.0
        %1326 = vmatmul.mubr.f32.gmra.mrb[0].mxu0 %v1254
        %v1327 = vpop.f32.mrb[0].mxu0
        %v1328 = vadd.f32 0.0, %v1327
        %v1329 = vpop.f32.mrb[0].mxu0
        %1330 = vdwg.mxu0
        %1331 = vrot.lane.b32.xlu0 %v541, 32
        %v1332 = vpop.permute.xlu0 %1331
        %1333 = vrot.lane.b32.xlu0 %v546, 32
        %v1334 = vpop.permute.xlu0 %1333
        %1335 = vrot.lane.b32.xlu0 %v632, 32
        %v1336 = vpop.permute.xlu0 %1335
        %1337 = vrot.lane.b32.xlu0 %v637, 32
        %v1338 = vpop.permute.xlu0 %1337
        %v1339 = vsel %vm731, %v1332, 0
        %v1341 = vsel %vm731, %v1334, 0
        %v1343 = vsel %vm731, %v1336, 0
        %v1345 = vsel %vm731, %v1338, 0
        %1347 = vmatprep.subr.mxu0 0.0
        %1348 = vmatpush1.xpose.msra.mxu0 %v1343
        %1349 = vmatprep.subr.mxu0 0.0
        %1350 = vmatpush1.xpose.msra.mxu0 %v1345
        %1351 = vmatprep.subr.mxu0 0.0
        %1352 = vmatpush1.xpose.msra.mxu0 0.0
        %1353 = vmatprep.subr.mxu0 0.0
        %1354 = vmatpush1.xpose.msra.mxu0 0.0
        %1355 = vmatprep.subr.mxu0 0.0
        %1356 = vmatpush1.xpose.msra.mxu0 0.0
        %1357 = vmatprep.subr.mxu0 0.0
        %1358 = vmatpush1.xpose.msra.mxu0 0.0
        %1359 = vmatprep.subr.mxu0 0.0
        %1360 = vmatpush1.xpose.msra.mxu0 0.0
        %1361 = vmatprep.subr.mxu0 0.0
        %1362 = vmatpush1.xpose.msra.mxu0 0.0
        %1363 = vmatprep.subr.mxu0 0.0
        %1364 = vmatpush1.xpose.msra.mxu0 0.0
        %1365 = vmatprep.subr.mxu0 0.0
        %1366 = vmatpush1.xpose.msra.mxu0 0.0
        %1367 = vmatprep.subr.mxu0 0.0
        %1368 = vmatpush1.xpose.msra.mxu0 0.0
        %1369 = vmatprep.subr.mxu0 0.0
        %1370 = vmatpush1.xpose.msra.mxu0 0.0
        %1371 = vmatprep.subr.mxu0 0.0
        %1372 = vmatpush1.xpose.msra.mxu0 0.0
        %1373 = vmatprep.subr.mxu0 0.0
        %1374 = vmatpush1.xpose.msra.mxu0 0.0
        %1375 = vmatprep.subr.mxu0 0.0
        %1376 = vmatpush1.xpose.msra.mxu0 0.0
        %1377 = vmatprep.subr.mxu0 0.0
        %1378 = vmatpush1.xpose.msra.mxu0 0.0
        %1379 = vmatprep.subr.mxu0 0.0
        %1380 = vmatpush1.xpose.msra.mxu0 0.0
        %1381 = vmatprep.subr.mxu0 0.0
        %1382 = vmatpush1.xpose.msra.mxu0 0.0
        %1383 = vmatprep.subr.mxu0 0.0
        %1384 = vmatpush1.xpose.msra.mxu0 0.0
        %1385 = vmatprep.subr.mxu0 0.0
        %1386 = vmatpush1.xpose.msra.mxu0 0.0
        %1387 = vmatprep.subr.mxu0 0.0
        %1388 = vmatpush1.xpose.msra.mxu0 0.0
        %1389 = vmatprep.subr.mxu0 0.0
        %1390 = vmatpush1.xpose.msra.mxu0 0.0
        %1391 = vmatprep.subr.mxu0 0.0
        %1392 = vmatpush1.xpose.msra.mxu0 0.0
        %1393 = vmatprep.subr.mxu0 0.0
        %1394 = vmatpush1.xpose.msra.mxu0 0.0
        %1395 = vmatprep.subr.mxu0 0.0
        %1396 = vmatpush1.xpose.msra.mxu0 0.0
        %1397 = vmatprep.subr.mxu0 0.0
        %1398 = vmatpush1.xpose.msra.mxu0 0.0
        %1399 = vmatprep.subr.mxu0 0.0
        %1400 = vmatpush1.xpose.msra.mxu0 0.0
        %1401 = vmatprep.subr.mxu0 0.0
        %1402 = vmatpush1.xpose.msra.mxu0 0.0
        %1403 = vmatprep.subr.mxu0 0.0
        %1404 = vmatpush1.xpose.msra.mxu0 0.0
        %1405 = vmatprep.subr.mxu0 0.0
        %1406 = vmatpush1.xpose.msra.mxu0 0.0
        %1407 = vmatprep.subr.mxu0 0.0
        %1408 = vmatpush1.xpose.msra.mxu0 0.0
        %1409 = vmatprep.subr.mxu0 0.0
        %1410 = vmatpush1.xpose.msra.mxu0 0.0
        %1411 = vmatprep.mubr.f32.mxu0 0.0
        %1412 = vmatmul.mubr.f32.gmra.mrb[0].mxu0 %v1339
        %v1413 = vpop.f32.mrb[0].mxu0
        %v1414 = vadd.f32 0.0, %v1413
        %v1415 = vpop.f32.mrb[0].mxu0
        %1416 = vmatprep.mubr.f32.mxu0 0.0
        %1417 = vmatmul.mubr.f32.gmra.mrb[0].mxu0 %v1341
        %v1418 = vpop.f32.mrb[0].mxu0
        %v1419 = vadd.f32 0.0, %v1418
        %v1420 = vpop.f32.mrb[0].mxu0
        %1421 = vdwg.mxu0
        %v1422 = vmul.f32 %v1414, 0.17677669
        %v1423 = vmul.f32 %v1419, 0.17677669
        %v1424 = vsel %vm821, %v1422, -inf
        %1425 = vmax.xlane.f32.xlu0 %v1424
        %v1426 = vpop.xlane.xlu0 %1425
        %v1427 = vsel %vm821, %v1423, -inf
        %1428 = vmax.xlane.f32.xlu0 %v1427
        %v1429 = vpop.xlane.xlu0 %1428
        %v1430 = vsub.f32 %v1422, %v1426
        %v1431 = vsub.f32 %v1423, %v1429
        %v1432 = vmul.f32 %v1430, 1.442695
        %v1433 = vpow.pop %v1432
        %v1434 = vmul.f32 %v1431, 1.442695
        %v1435 = vpow.pop %v1434
        %v1436 = vsel %vm821, %v1433, 0.0
        %1437 = vadd.xlane.f32.xlu0 %v1436
        %v1438 = vpop.xlane.xlu0 %1437
        %v1439 = vsel %vm821, %v1435, 0.0
        %1440 = vadd.xlane.f32.xlu0 %v1439
        %v1441 = vpop.xlane.xlu0 %1440
        %v1442 = vrcp.pop %v1438
        %v1443 = vrcp.pop %v1441
        %v1444 = vmul.f32 %v1433, %v1442
        %v1445 = vmul.f32 %v1435, %v1443
        %1446 = vrot.lane.b32.xlu0 %v723, 32
        %v1447 = vpop.permute.xlu0 %1446
        %1448 = vrot.lane.b32.xlu0 %v728, 32
        %v1449 = vpop.permute.xlu0 %1448
        %v1453 = vsel %vm821, %v1444, 0
        %v1456 = vsel %vm821, %v1445, 0
        %1458 = vmatprep.subr.mxu0 0.0
        %1459 = vmatpush1.msra.mxu0 %v1447
        %1460 = vmatprep.subr.mxu0 0.0
        %1461 = vmatpush1.msra.mxu0 %v1449
        %1462 = vmatprep.subr.mxu0 0.0
        %1463 = vmatpush1.msra.mxu0 0.0
        %1464 = vmatprep.subr.mxu0 0.0
        %1465 = vmatpush1.msra.mxu0 0.0
        %1466 = vmatprep.subr.mxu0 0.0
        %1467 = vmatpush1.msra.mxu0 0.0
        %1468 = vmatprep.subr.mxu0 0.0
        %1469 = vmatpush1.msra.mxu0 0.0
        %1470 = vmatprep.subr.mxu0 0.0
        %1471 = vmatpush1.msra.mxu0 0.0
        %1472 = vmatprep.subr.mxu0 0.0
        %1473 = vmatpush1.msra.mxu0 0.0
        %1474 = vmatprep.subr.mxu0 0.0
        %1475 = vmatpush1.msra.mxu0 0.0
        %1476 = vmatprep.subr.mxu0 0.0
        %1477 = vmatpush1.msra.mxu0 0.0
        %1478 = vmatprep.subr.mxu0 0.0
        %1479 = vmatpush1.msra.mxu0 0.0
        %1480 = vmatprep.subr.mxu0 0.0
        %1481 = vmatpush1.msra.mxu0 0.0
        %1482 = vmatprep.subr.mxu0 0.0
        %1483 = vmatpush1.msra.mxu0 0.0
        %1484 = vmatprep.subr.mxu0 0.0
        %1485 = vmatpush1.msra.mxu0 0.0
        %1486 = vmatprep.subr.mxu0 0.0
        %1487 = vmatpush1.msra.mxu0 0.0
        %1488 = vmatprep.subr.mxu0 0.0
        %1489 = vmatpush1.msra.mxu0 0.0
        %1490 = vmatprep.subr.mxu0 0.0
        %1491 = vmatpush1.msra.mxu0 0.0
        %1492 = vmatprep.subr.mxu0 0.0
        %1493 = vmatpush1.msra.mxu0 0.0
        %1494 = vmatprep.subr.mxu0 0.0
        %1495 = vmatpush1.msra.mxu0 0.0
        %1496 = vmatprep.subr.mxu0 0.0
        %1497 = vmatpush1.msra.mxu0 0.0
        %1498 = vmatprep.subr.mxu0 0.0
        %1499 = vmatpush1.msra.mxu0 0.0
        %1500 = vmatprep.subr.mxu0 0.0
        %1501 = vmatpush1.msra.mxu0 0.0
        %1502 = vmatprep.subr.mxu0 0.0
        %1503 = vmatpush1.msra.mxu0 0.0
        %1504 = vmatprep.subr.mxu0 0.0
        %1505 = vmatpush1.msra.mxu0 0.0
        %1506 = vmatprep.subr.mxu0 0.0
        %1507 = vmatpush1.msra.mxu0 0.0
        %1508 = vmatprep.subr.mxu0 0.0
        %1509 = vmatpush1.msra.mxu0 0.0
        %1510 = vmatprep.subr.mxu0 0.0
        %1511 = vmatpush1.msra.mxu0 0.0
        %1512 = vmatprep.subr.mxu0 0.0
        %1513 = vmatpush1.msra.mxu0 0.0
        %1514 = vmatprep.subr.mxu0 0.0
        %1515 = vmatpush1.msra.mxu0 0.0
        %1516 = vmatprep.subr.mxu0 0.0
        %1517 = vmatpush1.msra.mxu0 0.0
        %1518 = vmatprep.subr.mxu0 0.0
        %1519 = vmatpush1.msra.mxu0 0.0
        %1520 = vmatprep.subr.mxu0 0.0
        %1521 = vmatpush1.msra.mxu0 0.0
        %1522 = vmatprep.mubr.f32.mxu0 0.0
        %1523 = vmatmul.mubr.f32.gmra.mrb[0].mxu0 %v1453
        %v1524 = vpop.f32.mrb[0].mxu0
        %v1525 = vadd.f32 0.0, %v1524
        %v1526 = vpop.f32.mrb[0].mxu0
        %1527 = vmatprep.mubr.f32.mxu0 0.0
        %1528 = vmatmul.mubr.f32.gmra.mrb[0].mxu0 %v1456
        %v1529 = vpop.f32.mrb[0].mxu0
        %v1530 = vadd.f32 0.0, %v1529
        %v1531 = vpop.f32.mrb[0].mxu0
        %1532 = vdwg.mxu0
        %1535 = vrot.lane.b32.xlu0 %v1121, 32
        %v1536 = vpop.permute.xlu0 %1535
        %1537 = vrot.lane.b32.xlu0 %v1126, 32
        %v1538 = vpop.permute.xlu0 %1537
        %1543 = vrot.lane.b32.xlu0 %v1323, 64
        %v1544 = vpop.permute.xlu0 %1543
        %1545 = vrot.lane.b32.xlu0 %v1328, 64
        %v1546 = vpop.permute.xlu0 %1545
        %1551 = vrot.lane.b32.xlu0 %v1525, 96
        %v1552 = vpop.permute.xlu0 %1551
        %1553 = vrot.lane.b32.xlu0 %v1530, 96
        %v1554 = vpop.permute.xlu0 %1553
        %v1557 = vsel %vm731, %v917, %v1536
        %v1558 = vsel %vm731, %v922, %v1538
        %vm1559 = vcmask 523264
        %v1560 = vsel %vm1559, %v1557, %v1544
        %v1561 = vsel %vm1559, %v1558, %v1546
        %vm1562 = vcmask 785408
        %v1563 = vsel %vm1562, %v1560, %v1552
        %v1564 = vsel %vm1562, %v1561, %v1554
        %v1565 = vld [vmem:[#allocation13] sm:$0xff]
        %v1566 = vld [vmem:[#allocation13 + $0x8] sm:$0xff]
        %v1567 = vld [vmem:[#allocation13 + $0x10] sm:$0xff]
        %v1568 = vld [vmem:[#allocation13 + $0x18] sm:$0xff]
        %v1569 = vld [vmem:[#allocation13 + $0x20] sm:$0xff]
        %v1570 = vld [vmem:[#allocation13 + $0x28] sm:$0xff]
        %v1571 = vld [vmem:[#allocation13 + $0x30] sm:$0xff]
        %v1572 = vld [vmem:[#allocation13 + $0x38] sm:$0xff]
        %v1573 = vld [vmem:[#allocation13 + $0x40] sm:$0xff]
        %v1574 = vld [vmem:[#allocation13 + $0x48] sm:$0xff]
        %v1575 = vld [vmem:[#allocation13 + $0x50] sm:$0xff]
        %v1576 = vld [vmem:[#allocation13 + $0x58] sm:$0xff]
        %v1577 = vld [vmem:[#allocation13 + $0x60] sm:$0xff]
        %v1578 = vld [vmem:[#allocation13 + $0x68] sm:$0xff]
        %v1579 = vld [vmem:[#allocation13 + $0x70] sm:$0xff]
        %v1580 = vld [vmem:[#allocation13 + $0x78] sm:$0xff]
        %1581 = vmatprep.subr.mxu0 0.0
        %1582 = vmatpush1.msra.mxu0 %v1565
        %1583 = vmatprep.subr.mxu0 0.0
        %1584 = vmatpush1.msra.mxu0 %v1566
        %1585 = vmatprep.subr.mxu0 0.0
        %1586 = vmatpush1.msra.mxu0 %v1567
        %1587 = vmatprep.subr.mxu0 0.0
        %1588 = vmatpush1.msra.mxu0 %v1568
        %1589 = vmatprep.subr.mxu0 0.0
        %1590 = vmatpush1.msra.mxu0 %v1569
        %1591 = vmatprep.subr.mxu0 0.0
        %1592 = vmatpush1.msra.mxu0 %v1570
        %1593 = vmatprep.subr.mxu0 0.0
        %1594 = vmatpush1.msra.mxu0 %v1571
        %1595 = vmatprep.subr.mxu0 0.0
        %1596 = vmatpush1.msra.mxu0 %v1572
        %1597 = vmatprep.subr.mxu0 0.0
        %1598 = vmatpush1.msra.mxu0 %v1573
        %1599 = vmatprep.subr.mxu0 0.0
        %1600 = vmatpush1.msra.mxu0 %v1574
        %1601 = vmatprep.subr.mxu0 0.0
        %1602 = vmatpush1.msra.mxu0 %v1575
        %1603 = vmatprep.subr.mxu0 0.0
        %1604 = vmatpush1.msra.mxu0 %v1576
        %1605 = vmatprep.subr.mxu0 0.0
        %1606 = vmatpush1.msra.mxu0 %v1577
        %1607 = vmatprep.subr.mxu0 0.0
        %1608 = vmatpush1.msra.mxu0 %v1578
        %1609 = vmatprep.subr.mxu0 0.0
        %1610 = vmatpush1.msra.mxu0 %v1579
        %1611 = vmatprep.subr.mxu0 0.0
        %1612 = vmatpush1.msra.mxu0 %v1580
        %1613 = vmatprep.subr.mxu0 0.0
        %1614 = vmatpush1.msra.mxu0 0.0
        %1615 = vmatprep.subr.mxu0 0.0
        %1616 = vmatpush1.msra.mxu0 0.0
        %1617 = vmatprep.subr.mxu0 0.0
        %1618 = vmatpush1.msra.mxu0 0.0
        %1619 = vmatprep.subr.mxu0 0.0
        %1620 = vmatpush1.msra.mxu0 0.0
        %1621 = vmatprep.subr.mxu0 0.0
        %1622 = vmatpush1.msra.mxu0 0.0
        %1623 = vmatprep.subr.mxu0 0.0
        %1624 = vmatpush1.msra.mxu0 0.0
        %1625 = vmatprep.subr.mxu0 0.0
        %1626 = vmatpush1.msra.mxu0 0.0
        %1627 = vmatprep.subr.mxu0 0.0
        %1628 = vmatpush1.msra.mxu0 0.0
        %1629 = vmatprep.subr.mxu0 0.0
        %1630 = vmatpush1.msra.mxu0 0.0
        %1631 = vmatprep.subr.mxu0 0.0
        %1632 = vmatpush1.msra.mxu0 0.0
        %1633 = vmatprep.subr.mxu0 0.0
        %1634 = vmatpush1.msra.mxu0 0.0
        %1635 = vmatprep.subr.mxu0 0.0
        %1636 = vmatpush1.msra.mxu0 0.0
        %1637 = vmatprep.subr.mxu0 0.0
        %1638 = vmatpush1.msra.mxu0 0.0
        %1639 = vmatprep.subr.mxu0 0.0
        %1640 = vmatpush1.msra.mxu0 0.0
        %1641 = vmatprep.subr.mxu0 0.0
        %1642 = vmatpush1.msra.mxu0 0.0
        %1643 = vmatprep.subr.mxu0 0.0
        %1644 = vmatpush1.msra.mxu0 0.0
        %1645 = vmatprep.mubr.f32.mxu0 0.0
        %1646 = vmatmul.mubr.f32.gmra.mrb[0].mxu0 %v1563
        %v1647 = vpop.f32.mrb[0].mxu0
        %v1648 = vadd.f32 0.0, %v1647
        %v1649 = vpop.f32.mrb[0].mxu0
        %1650 = vmatprep.mubr.f32.mxu0 0.0
        %1651 = vmatmul.mubr.f32.gmra.mrb[0].mxu0 %v1564
        %v1652 = vpop.f32.mrb[0].mxu0
        %v1653 = vadd.f32 0.0, %v1652
        %v1654 = vpop.f32.mrb[0].mxu0
        %1655 = vdwg.mxu0
        %1656 = vst [vmem:[%s449] sm:$0xff] %v1648
        %1657 = vst [vmem:[%s449 + $0x8] sm:$0xff] %v1653
        %s1658 = sand.u32 %s215, 1
        %s1659 = scalar_lea.sflag [#allocation4], %s1658
        %s1660 = sand.u32 %s215, 1
        %s1661 = smul.addr %s1660, 16
        %s1662 = scalar_lea.vmem [#allocation14], %s1661
        // Predicated region
        $region77: #{tpu_custom_call.1} parent=47 // pred_check
          %p1663 = pneg %p225
        $region78: #{tpu_custom_call.1} parent=47 // pred_check_branch
          %1665 = sbr.rel (%p1663) target = $region80
        $region79: #{tpu_custom_call.1} parent=47 // pred_region
          %s1666 = smul.u32 2, %s34
          %s1668 = ssub.s32 256, 256
          %1669 = vsyncadd %s1659, %s1668
          %s1670 = smul.addr %s33, 2
          %s1671 = sadd.s32 %s1666, %s1670
          %s1672 = smul.addr %s1671, 128
          %s1673 = scalar_lea.hbm %s7, %s1672
          %s1674 = sshll.u32 %s1662, 4
          %s1675 = int_to_ptr.vmem [resolvable:$true] %s1674
          %1680 = dma.vmem_to_hbm [thread:$0]  %s1675, 256, %s1673, %s1659, 128, 128, 8
        $region80: #{tpu_custom_call.1} parent=47 // pred_fallthru
          _
      $region48: #{tpu_custom_call.1} parent=5 // pred_fallthru
        _
      %p1681 = scmp.le.s32.totalorder 2, %s24
      // Predicated region
      $region81: #{tpu_custom_call.1} parent=5 // pred_check
        %p1682 = pneg %p1681
      $region82: #{tpu_custom_call.1} parent=5 // pred_check_branch
        %1684 = sbr.rel (%p1682) target = $region84
      $region83: #{tpu_custom_call.1} parent=5 // pred_region
        %s1685 = ssub.s32 %s24, 2
        // Predicated region
        $region85: #{tpu_custom_call.1} parent=83 // pred_check
          %p1686 = pneg %p231
        $region86: #{tpu_custom_call.1} parent=83 // pred_check_branch
          %1688 = sbr.rel (%p1686) target = $region88
        $region87: #{tpu_custom_call.1} parent=83 // pred_region
          %s1689 = sand.u32 %s216, 1
          %s1690 = scalar_lea.sflag [#allocation4], %s1689
          %s1691 = sand.u32 %s216, 1
          %s1692 = smul.addr %s1691, 16
          %s1693 = scalar_lea.vmem [#allocation14], %s1692
          %1694 = dma.done %s1690, 256
        $region88: #{tpu_custom_call.1} parent=83 // pred_fallthru
          _
      $region84: #{tpu_custom_call.1} parent=5 // pred_fallthru
        _
    $region6: #{tpu_custom_call.1} parent=1 // loop_footer
      %s28 = sadd.s32 1, %s24
    $region7: #{tpu_custom_call.1} parent=1 // loop_footer_branch
      %23 = sbr.rel target = $region3
    $region8: #{tpu_custom_call.1} parent=1 // loop_exit
      _
    %1695 = vsyncpa [#allocation3], 1
    %s1696 = scalar_lea.sflag [#allocation3], 1
    %1697 = vsyncpa %s1696, 1
    %1698 = vsyncpa [#allocation6], 1
    %s1699 = scalar_lea.sflag [#allocation6], 1
    %1700 = vsyncpa %s1699, 1
    %1701 = vsyncpa [#allocation9], 1
    %1702 = vsyncpa [#allocation12], 1
    %1703 = vsyncpa [#allocation4], 1
    %s1704 = scalar_lea.sflag [#allocation4], 1
    %1705 = vsyncpa %s1704, 1

</llo_original>
